<compile_context>
chip_gen: v5e
topology: v5e:2x2
jax: 0.10.0
libtpu: 0.0.40
codegen_flags: <defaults>
</compile_context>

<pallas_src>
import functools

import numpy as np
import jax
import jax.numpy as jnp
from jax.experimental import pallas as pl
from jax.experimental.pallas import tpu as pltpu

_LANE = 128
_SUB = 8


def _round_up(x, m):
    return ((x + m - 1) // m) * m


# ----------------------------------------------------------------------------
# Pallas kernel: pairwise sum of squared differences between sorted rows.
#   SSD[p, i, j] = sum_k (sorted_style[p, i, k] - sorted_trans[p, j, k])^2
# Grid = (P pairs, K tiles); K tiles accumulate into lane-shaped VMEM scratch.
# ----------------------------------------------------------------------------
def _pairwise_ssd_kernel(s_ref, t_ref, o_ref, acc_ref, *, batch):
    # s_ref, t_ref: (1, B, row_tile, 128) tiles of sorted style / translate.
    # o_ref:        (1, B, B) per-pair output (written on the last K step).
    # acc_ref:      (B, B, 8, 128) f32 lane-shaped accumulator.
    k = pl.program_id(1)

    @pl.when(k == 0)
    def _init():
        acc_ref[...] = jnp.zeros_like(acc_ref)

    rows = []
    for i in range(batch):                       # B is small & static -> unrolled
        s_i = s_ref[0, i]                        # (row_tile, 128)
        cols = []
        for j in range(batch):
            d = s_i - t_ref[0, j]                # VPU
            dd = d * d                           # VPU
            # Fold the row_tile sublane-groups into a single (8, 128) vreg:
            # pure elementwise vreg adds, no cross-lane work in the hot loop.
            cols.append(jnp.sum(dd.reshape(-1, _SUB, _LANE), axis=0))
        rows.append(jnp.stack(cols))             # (B, 8, 128)

    # ONE accumulator read-modify-write per K step (full, unmasked vregs).
    acc_ref[...] += jnp.stack(rows)              # (B, B, 8, 128)

    @pl.when(k == pl.num_programs(1) - 1)
    def _finalize():
        part = jnp.sum(acc_ref[...], axis=2)     # (B, B, 128)  sublane reduce
        o_ref[0] = jnp.sum(part, axis=2)         # (B, B)       lane reduce


def _pairwise_ssd(S, T, row_tile):
    """S, T: (P, B, R, 128) f32 with R % row_tile == 0  ->  (P, B, B) f32."""
    P, B, R, L = S.shape
    assert L == _LANE and R % row_tile == 0 and row_tile % _SUB == 0
    nk = R // row_tile
    kernel = functools.partial(_pairwise_ssd_kernel, batch=B)
    return pl.pallas_call(
        kernel,
        out_shape=jax.ShapeDtypeStruct((P, B, B), jnp.float32),
        grid_spec=pltpu.PrefetchScalarGridSpec(
            num_scalar_prefetch=0,
            grid=(P, nk),                        # reduction (K) axis LAST
            in_specs=[
                pl.BlockSpec((1, B, row_tile, _LANE), lambda p, k: (p, 0, k, 0)),
                pl.BlockSpec((1, B, row_tile, _LANE), lambda p, k: (p, 0, k, 0)),
            ],
            out_specs=pl.BlockSpec((1, B, B), lambda p, k: (p, 0, 0)),
            scratch_shapes=[pltpu.VMEM((B, B, _SUB, _LANE), jnp.float32)],
        ),
        compiler_params=pltpu.CompilerParams(
            # Pair axis "parallel" -> shardable across v7x's 2 TensorCores
            # (no-op on v5e/v6e).  K axis carries the accumulator.
            dimension_semantics=("parallel", "arbitrary"),
            # v7x-safe cap (64 MiB physical); tiles are sized to fit well
            # below this, so v5e/v6e (128 MiB physical) need nothing more.
            vmem_limit_bytes=48 * 1024 * 1024,
        ),
    )(S, T)


# ----------------------------------------------------------------------------
# EFDM loss
# ----------------------------------------------------------------------------
def _prep_pair(style, trans):
    """Sort each (b, c) spatial row; return flattened (B, C*H*W) and count."""
    B, C, H, W = style.shape
    N = H * W
    s = jnp.sort(style.astype(jnp.float32).reshape(B, C, N), axis=-1)
    t = jnp.sort(trans.astype(jnp.float32).reshape(B, C, N), axis=-1)
    return s.reshape(B, C * N), t.reshape(B, C * N), C * N


@functools.partial(jax.jit, static_argnames=("block_rows",))
def _efdm_loss_impl(style_E, style_S, translate_E, translate_S, neg_mask,
                    block_rows=1024):
    # Collect every (style, translate) feature pair efdm_single is called on.
    pairs = []
    for st, tr in zip(style_E, translate_E):
        for s_map, t_map in zip(st, tr):          # (hf, lf)
            pairs.append((s_map, t_map))
    for st, tr in zip(style_S, translate_S):
        for s_map, t_map in zip(st, tr):
            pairs.append((s_map, t_map))

    B = pairs[0][0].shape[0]

    # --- per-pair tiling (all row counts are static at trace time) ----------
    block_rows = max(_SUB, (int(block_rows) // _SUB) * _SUB)
    # Keep 2 inputs x 2 pipeline buffers comfortably under the v7x VMEM cap.
    vmem_budget = 24 * 1024 * 1024
    cap_rows = max(_SUB, (vmem_budget // (2 * 2 * B * _LANE * 4)) // _SUB * _SUB)

    prepped = []
    for s_map, t_map in pairs:
        s_flat, t_flat, cnt = _prep_pair(s_map, t_map)
        rows = -(-cnt // _LANE)
        rows8 = _round_up(rows, _SUB)
        row_tile = max(_SUB, min(block_rows, cap_rows, rows8))
        rows_pad = _round_up(rows8, row_tile)
        prepped.append((s_flat, t_flat, cnt, rows_pad, row_tile))

    # Bucket pairs by (rows_pad, row_tile): no padding to Kmax, waste per pair
    # is bounded by < row_tile rows (exact: zero tails cancel in the SSD).
    buckets = {}
    for s_flat, t_flat, cnt, rows_pad, row_tile in prepped:
        key = (rows_pad, row_tile)
        b = buckets.setdefault(key, {"s": [], "t": [], "cnt": []})
        b["s"].append(s_flat)
        b["t"].append(t_flat)
        b["cnt"].append(cnt)

    def _pad_reshape(x, rows_pad):
        k_pad = rows_pad * _LANE
        return jnp.pad(x, ((0, 0), (0, k_pad - x.shape[1]))).reshape(
            B, rows_pad, _LANE)

    # cross_sum[i, j] = sum over all pairs of MSE(style batch i, trans batch j)
    cross_sum = jnp.zeros((B, B), jnp.float32)
    for (rows_pad, row_tile), data in buckets.items():
        S = jnp.stack([_pad_reshape(x, rows_pad) for x in data["s"]])
        T = jnp.stack([_pad_reshape(x, rows_pad) for x in data["t"]])
        ssd = _pairwise_ssd(S, T, row_tile)                       # (P_b, B, B)
        counts = jnp.asarray(data["cnt"], jnp.float32)[:, None, None]
        cross_sum = cross_sum + jnp.sum(ssd / counts, axis=0)

    # Positive terms: style index b vs translate index b, summed over pairs.
    poss = jnp.diagonal(cross_sum)                                # (B,)
    # Negative terms: style index nb (nb in neg_idx[b]) vs translate index b.
    neg = jnp.sum(neg_mask * cross_sum, axis=0)                   # (B,)
    return jnp.sum(poss / neg)


def efdm_loss(style_E, style_S, translate_E, translate_S, neg_idx,
              block_rows=1024):
    """Forward pass of EFDM_loss.  neg_idx: list (len B) of lists of negative
    batch indices (static python ints, exactly like the PyTorch call site)."""
    B = style_E[0][0].shape[0]
    neg_mask = np.zeros((B, B), np.float32)
    for b in range(B):
        for nb in neg_idx[b]:
            neg_mask[int(nb), b] += 1.0       # rows: style idx, cols: trans idx
    return _efdm_loss_impl(style_E, style_S, translate_E, translate_S,
                           jnp.asarray(neg_mask), block_rows=block_rows)


# ----------------------------------------------------------------------------
# Pure-JAX literal reference (sort + argsort + gather, mirrors the PyTorch code)
# ----------------------------------------------------------------------------
def _efdm_single_ref(style, trans):
    B, C, H, W = style.shape
    s = style.reshape(B, C, H * W)
    t = trans.reshape(B, C, H * W)
    value_style = jnp.sort(s, axis=-1)
    index_trans = jnp.argsort(t, axis=-1)
    inverse_index = jnp.argsort(index_trans, axis=-1)
    matched = jnp.take_along_axis(value_style, inverse_index, axis=-1)
    return jnp.mean((t - matched) ** 2)


def efdm_loss_reference(style_E, style_S, translate_E, translate_S, neg_idx):
    loss = 0.0
    batch = style_E[0][0].shape[0]
    for b in range(batch):
        poss = 0.0
        neg = 0.0
        for i in range(len(style_E)):
            poss = poss + _efdm_single_ref(style_E[i][0][b:b + 1], translate_E[i][0][b:b + 1]) \
                        + _efdm_single_ref(style_E[i][1][b:b + 1], translate_E[i][1][b:b + 1])
        for i in range(len(style_S)):
            poss = poss + _efdm_single_ref(style_S[i][0][b:b + 1], translate_S[i][0][b:b + 1]) \
                        + _efdm_single_ref(style_S[i][1][b:b + 1], translate_S[i][1][b:b + 1])
        for nb in neg_idx[b]:
            for i in range(len(style_E)):
                neg = neg + _efdm_single_ref(style_E[i][0][nb:nb + 1], translate_E[i][0][b:b + 1]) \
                          + _efdm_single_ref(style_E[i][1][nb:nb + 1], translate_E[i][1][b:b + 1])
            for i in range(len(style_S)):
                neg = neg + _efdm_single_ref(style_S[i][0][nb:nb + 1], translate_S[i][0][b:b + 1]) \
                          + _efdm_single_ref(style_S[i][1][nb:nb + 1], translate_S[i][1][b:b + 1])
        loss = loss + poss / neg
    return loss


if __name__ == "__main__":
    key = jax.random.PRNGKey(0)

    # Small encoder-feature shapes consistent with the call site:
    #   style_E / translate_E : 2 levels of (hf, lf) octave features
    #   style_S / translate_S : 3 levels (the same two + a downsampled one)
    B, nf = 2, 32
    shapes_E = [((B, 2 * nf, 16, 16), (B, 2 * nf, 8, 8)),
                ((B, 4 * nf, 8, 8), (B, 4 * nf, 4, 4))]
    shapes_S = shapes_E + [((B, 4 * nf, 4, 4), (B, 4 * nf, 2, 2))]

    def make_feats(key, shapes):
        feats = []
        for hf_shape, lf_shape in shapes:
            key, k1, k2 = jax.random.split(key, 3)
            feats.append((jax.random.normal(k1, hf_shape, jnp.float32),
                          jax.random.normal(k2, lf_shape, jnp.float32)))
        return key, feats

    key, style_E = make_feats(key, shapes_E)
    key, style_S = make_feats(key, shapes_S)
    key, translate_E = make_feats(key, shapes_E)
    key, translate_S = make_feats(key, shapes_S)

    neg_idx = [[1], [0]]   # each sample's negative set = the other sample

    # block_rows=32 keeps the demo's K reduction multi-step (exercising the
    # init / accumulate / finalize accumulator path) while padding waste stays
    # tiny; real feature maps should use the default 1024 ("biggest tile that
    # fits", capped against VMEM).
    loss = efdm_loss(style_E, style_S, translate_E, translate_S, neg_idx,
                     block_rows=32)
    loss = jax.block_until_ready(loss)

    # Correctness check against the literal (sort + argsort + gather) reference.
    ref_fn = jax.jit(lambda a, b, c, d: efdm_loss_reference(a, b, c, d, neg_idx))
    ref = jax.block_until_ready(ref_fn(style_E, style_S, translate_E, translate_S))

    np.testing.assert_allclose(np.asarray(loss), np.asarray(ref),
                               rtol=2e-4, atol=1e-5)
    assert np.isfinite(np.asarray(loss))

    # TODO(synk): torch.sort itself has no Pallas/Mosaic lowering; the per-row
    # sort runs in XLA (jnp.sort) and only the pairwise SSD reduction is a
    # Pallas kernel (the argsort + gather are eliminated algebraically).
    print("KERNEL_OK")
</pallas_src>

<mosaic_0001>
module attributes {stable_mosaic.version = 11 : i64} {
  func.func @_pairwise_ssd_kernel(%arg0: i32, %arg1: i32, %arg2: memref<1x2x32x128xf32, #tpu.memory_space<vmem>>, %arg3: memref<1x2x32x128xf32, #tpu.memory_space<vmem>>, %arg4: memref<1x2x2xf32, #tpu.memory_space<vmem>>, %arg5: memref<2x2x8x128xf32, #tpu.memory_space<vmem>>) attributes {dimension_semantics = [#tpu.dimension_semantics<parallel>, #tpu.dimension_semantics<arbitrary>], iteration_bounds = array<i64: 2, 4>, scalar_prefetch = 0 : i64, scratch_operands = 1 : i64, tpu.core_type = #tpu.core_type<tc>, window_params = [{transform_indices = @transform_0, window_bounds = array<i64: 1, 2, 32, 128>}, {transform_indices = @transform_1, window_bounds = array<i64: 1, 2, 32, 128>}, {transform_indices = @transform_2, window_bounds = array<i64: 1, 2, 2>}]} {
    %c0_i32 = arith.constant 0 : i32
    %0 = arith.cmpi eq, %arg1, %c0_i32 : i32
    %1 = arith.extui %0 : i1 to i32
    %c0_i32_0 = arith.constant 0 : i32
    %2 = arith.cmpi ne, %1, %c0_i32_0 : i32
    scf.if %2 {
      %cst_35 = arith.constant 0.000000e+00 : f32
      %46 = vector.broadcast %cst_35 : f32 to vector<2x2x8x128xf32>
      %c0_36 = arith.constant 0 : index
      %c0_37 = arith.constant 0 : index
      %c0_38 = arith.constant 0 : index
      %c0_39 = arith.constant 0 : index
      %47 = vector.load %arg5[%c0_36, %c0_37, %c0_38, %c0_39] : memref<2x2x8x128xf32, #tpu.memory_space<vmem>>, vector<2x2x8x128xf32>
      tpu.vector_store %arg5[%c0_36, %c0_37, %c0_38, %c0_39], %46 {strides = array<i32>} : memref<2x2x8x128xf32, #tpu.memory_space<vmem>>, vector<2x2x8x128xf32>,
    } else {
    }
    %c0 = arith.constant 0 : index
    %c0_1 = arith.constant 0 : index
    %c0_2 = arith.constant 0 : index
    %c0_3 = arith.constant 0 : index
    %3 = vector.load %arg2[%c0, %c0_1, %c0_2, %c0_3] : memref<1x2x32x128xf32, #tpu.memory_space<vmem>>, vector<1x1x32x128xf32>
    %4 = vector.shape_cast %3 : vector<1x1x32x128xf32> to vector<32x128xf32>
    %c0_4 = arith.constant 0 : index
    %c0_5 = arith.constant 0 : index
    %c0_6 = arith.constant 0 : index
    %c0_7 = arith.constant 0 : index
    %5 = vector.load %arg3[%c0_4, %c0_5, %c0_6, %c0_7] : memref<1x2x32x128xf32, #tpu.memory_space<vmem>>, vector<1x1x32x128xf32>
    %6 = vector.shape_cast %5 : vector<1x1x32x128xf32> to vector<32x128xf32>
    %7 = arith.subf %4, %6 : vector<32x128xf32>
    %8 = arith.mulf %7, %7 : vector<32x128xf32>
    %9 = vector.shape_cast %8 : vector<32x128xf32> to vector<4x8x128xf32>
    %cst = arith.constant dense<0.000000e+00> : vector<8x128xf32>
    %10 = vector.multi_reduction <add>, %9, %cst [0] : vector<4x8x128xf32> to vector<8x128xf32>
    %c0_8 = arith.constant 0 : index
    %c1 = arith.constant 1 : index
    %c0_9 = arith.constant 0 : index
    %c0_10 = arith.constant 0 : index
    %11 = vector.load %arg3[%c0_8, %c1, %c0_9, %c0_10] : memref<1x2x32x128xf32, #tpu.memory_space<vmem>>, vector<1x1x32x128xf32>
    %12 = vector.shape_cast %11 : vector<1x1x32x128xf32> to vector<32x128xf32>
    %13 = arith.subf %4, %12 : vector<32x128xf32>
    %14 = arith.mulf %13, %13 : vector<32x128xf32>
    %15 = vector.shape_cast %14 : vector<32x128xf32> to vector<4x8x128xf32>
    %cst_11 = arith.constant dense<0.000000e+00> : vector<8x128xf32>
    %16 = vector.multi_reduction <add>, %15, %cst_11 [0] : vector<4x8x128xf32> to vector<8x128xf32>
    %17 = vector.shape_cast %10 : vector<8x128xf32> to vector<1x8x128xf32>
    %18 = vector.shape_cast %16 : vector<8x128xf32> to vector<1x8x128xf32>
    %19 = tpu.concatenate %17, %18 in 0 : vector<1x8x128xf32>, vector<1x8x128xf32> -> vector<2x8x128xf32>
    %c0_12 = arith.constant 0 : index
    %c1_13 = arith.constant 1 : index
    %c0_14 = arith.constant 0 : index
    %c0_15 = arith.constant 0 : index
    %20 = vector.load %arg2[%c0_12, %c1_13, %c0_14, %c0_15] : memref<1x2x32x128xf32, #tpu.memory_space<vmem>>, vector<1x1x32x128xf32>
    %21 = vector.shape_cast %20 : vector<1x1x32x128xf32> to vector<32x128xf32>
    %c0_16 = arith.constant 0 : index
    %c0_17 = arith.constant 0 : index
    %c0_18 = arith.constant 0 : index
    %c0_19 = arith.constant 0 : index
    %22 = vector.load %arg3[%c0_16, %c0_17, %c0_18, %c0_19] : memref<1x2x32x128xf32, #tpu.memory_space<vmem>>, vector<1x1x32x128xf32>
    %23 = vector.shape_cast %22 : vector<1x1x32x128xf32> to vector<32x128xf32>
    %24 = arith.subf %21, %23 : vector<32x128xf32>
    %25 = arith.mulf %24, %24 : vector<32x128xf32>
    %26 = vector.shape_cast %25 : vector<32x128xf32> to vector<4x8x128xf32>
    %cst_20 = arith.constant dense<0.000000e+00> : vector<8x128xf32>
    %27 = vector.multi_reduction <add>, %26, %cst_20 [0] : vector<4x8x128xf32> to vector<8x128xf32>
    %c0_21 = arith.constant 0 : index
    %c1_22 = arith.constant 1 : index
    %c0_23 = arith.constant 0 : index
    %c0_24 = arith.constant 0 : index
    %28 = vector.load %arg3[%c0_21, %c1_22, %c0_23, %c0_24] : memref<1x2x32x128xf32, #tpu.memory_space<vmem>>, vector<1x1x32x128xf32>
    %29 = vector.shape_cast %28 : vector<1x1x32x128xf32> to vector<32x128xf32>
    %30 = arith.subf %21, %29 : vector<32x128xf32>
    %31 = arith.mulf %30, %30 : vector<32x128xf32>
    %32 = vector.shape_cast %31 : vector<32x128xf32> to vector<4x8x128xf32>
    %cst_25 = arith.constant dense<0.000000e+00> : vector<8x128xf32>
    %33 = vector.multi_reduction <add>, %32, %cst_25 [0] : vector<4x8x128xf32> to vector<8x128xf32>
    %34 = vector.shape_cast %27 : vector<8x128xf32> to vector<1x8x128xf32>
    %35 = vector.shape_cast %33 : vector<8x128xf32> to vector<1x8x128xf32>
    %36 = tpu.concatenate %34, %35 in 0 : vector<1x8x128xf32>, vector<1x8x128xf32> -> vector<2x8x128xf32>
    %c0_26 = arith.constant 0 : index
    %c0_27 = arith.constant 0 : index
    %c0_28 = arith.constant 0 : index
    %c0_29 = arith.constant 0 : index
    %37 = vector.load %arg5[%c0_26, %c0_27, %c0_28, %c0_29] : memref<2x2x8x128xf32, #tpu.memory_space<vmem>>, vector<2x2x8x128xf32>
    %38 = vector.shape_cast %19 : vector<2x8x128xf32> to vector<1x2x8x128xf32>
    %39 = vector.shape_cast %36 : vector<2x8x128xf32> to vector<1x2x8x128xf32>
    %40 = tpu.concatenate %38, %39 in 0 : vector<1x2x8x128xf32>, vector<1x2x8x128xf32> -> vector<2x2x8x128xf32>
    %41 = arith.addf %37, %40 : vector<2x2x8x128xf32>
    %c0_30 = arith.constant 0 : index
    %c0_31 = arith.constant 0 : index
    %c0_32 = arith.constant 0 : index
    %c0_33 = arith.constant 0 : index
    %42 = vector.load %arg5[%c0_30, %c0_31, %c0_32, %c0_33] : memref<2x2x8x128xf32, #tpu.memory_space<vmem>>, vector<2x2x8x128xf32>
    tpu.vector_store %arg5[%c0_30, %c0_31, %c0_32, %c0_33], %41 {strides = array<i32>} : memref<2x2x8x128xf32, #tpu.memory_space<vmem>>, vector<2x2x8x128xf32>,
    %c3_i32 = arith.constant 3 : i32
    %43 = arith.cmpi eq, %arg1, %c3_i32 : i32
    %44 = arith.extui %43 : i1 to i32
    %c0_i32_34 = arith.constant 0 : i32
    %45 = arith.cmpi ne, %44, %c0_i32_34 : i32
    scf.if %45 {
      %c0_35 = arith.constant 0 : index
      %c0_36 = arith.constant 0 : index
      %c0_37 = arith.constant 0 : index
      %c0_38 = arith.constant 0 : index
      %46 = vector.load %arg5[%c0_35, %c0_36, %c0_37, %c0_38] : memref<2x2x8x128xf32, #tpu.memory_space<vmem>>, vector<2x2x8x128xf32>
      %cst_39 = arith.constant dense<0.000000e+00> : vector<2x2x128xf32>
      %47 = vector.multi_reduction <add>, %46, %cst_39 [2] : vector<2x2x8x128xf32> to vector<2x2x128xf32>
      %cst_40 = arith.constant dense<0.000000e+00> : vector<2x2xf32>
      %48 = vector.multi_reduction <add>, %47, %cst_40 [2] : vector<2x2x128xf32> to vector<2x2xf32>
      %c0_41 = arith.constant 0 : index
      %c0_42 = arith.constant 0 : index
      %c0_43 = arith.constant 0 : index
      %49 = vector.load %arg4[%c0_41, %c0_42, %c0_43] : memref<1x2x2xf32, #tpu.memory_space<vmem>>, vector<1x2x2xf32>
      %50 = vector.shape_cast %49 : vector<1x2x2xf32> to vector<2x2xf32>
      %51 = vector.shape_cast %48 : vector<2x2xf32> to vector<1x2x2xf32>
      tpu.vector_store %arg4[%c0_41, %c0_42, %c0_43], %51 {strides = array<i32>} : memref<1x2x2xf32, #tpu.memory_space<vmem>>, vector<1x2x2xf32>,
    } else {
    }
    return
  }
  func.func @transform_0(%arg0: i32, %arg1: i32) -> (i32, i32, i32, i32) {
    %c0_i32 = arith.constant 0 : i32
    %c0_i32_0 = arith.constant 0 : i32
    %c0_i32_1 = arith.constant 0 : i32
    return %arg0, %c0_i32, %arg1, %c0_i32_0 : i32, i32, i32, i32
  }
  func.func @transform_1(%arg0: i32, %arg1: i32) -> (i32, i32, i32, i32) {
    %c0_i32 = arith.constant 0 : i32
    %c0_i32_0 = arith.constant 0 : i32
    %c0_i32_1 = arith.constant 0 : i32
    return %arg0, %c0_i32, %arg1, %c0_i32_0 : i32, i32, i32, i32
  }
  func.func @transform_2(%arg0: i32, %arg1: i32) -> (i32, i32, i32) {
    %c0_i32 = arith.constant 0 : i32
    %c0_i32_0 = arith.constant 0 : i32
    %c0_i32_1 = arith.constant 0 : i32
    return %arg0, %c0_i32, %c0_i32_0 : i32, i32, i32
  }
}

module attributes {stable_mosaic.version = 11 : i64} {
  func.func @_pairwise_ssd_kernel(%arg0: i32, %arg1: i32, %arg2: memref<1x2x32x128xf32, #tpu.memory_space<vmem>>, %arg3: memref<1x2x32x128xf32, #tpu.memory_space<vmem>>, %arg4: memref<1x2x2xf32, #tpu.memory_space<vmem>>, %arg5: memref<2x2x8x128xf32, #tpu.memory_space<vmem>>) attributes {dimension_semantics = [#tpu.dimension_semantics<parallel>, #tpu.dimension_semantics<arbitrary>], iteration_bounds = array<i64: 2, 2>, scalar_prefetch = 0 : i64, scratch_operands = 1 : i64, tpu.core_type = #tpu.core_type<tc>, window_params = [{transform_indices = @transform_0, window_bounds = array<i64: 1, 2, 32, 128>}, {transform_indices = @transform_1, window_bounds = array<i64: 1, 2, 32, 128>}, {transform_indices = @transform_2, window_bounds = array<i64: 1, 2, 2>}]} {
    %c0_i32 = arith.constant 0 : i32
    %0 = arith.cmpi eq, %arg1, %c0_i32 : i32
    %1 = arith.extui %0 : i1 to i32
    %c0_i32_0 = arith.constant 0 : i32
    %2 = arith.cmpi ne, %1, %c0_i32_0 : i32
    scf.if %2 {
      %cst_35 = arith.constant 0.000000e+00 : f32
      %46 = vector.broadcast %cst_35 : f32 to vector<2x2x8x128xf32>
      %c0_36 = arith.constant 0 : index
      %c0_37 = arith.constant 0 : index
      %c0_38 = arith.constant 0 : index
      %c0_39 = arith.constant 0 : index
      %47 = vector.load %arg5[%c0_36, %c0_37, %c0_38, %c0_39] : memref<2x2x8x128xf32, #tpu.memory_space<vmem>>, vector<2x2x8x128xf32>
      tpu.vector_store %arg5[%c0_36, %c0_37, %c0_38, %c0_39], %46 {strides = array<i32>} : memref<2x2x8x128xf32, #tpu.memory_space<vmem>>, vector<2x2x8x128xf32>,
    } else {
    }
    %c0 = arith.constant 0 : index
    %c0_1 = arith.constant 0 : index
    %c0_2 = arith.constant 0 : index
    %c0_3 = arith.constant 0 : index
    %3 = vector.load %arg2[%c0, %c0_1, %c0_2, %c0_3] : memref<1x2x32x128xf32, #tpu.memory_space<vmem>>, vector<1x1x32x128xf32>
    %4 = vector.shape_cast %3 : vector<1x1x32x128xf32> to vector<32x128xf32>
    %c0_4 = arith.constant 0 : index
    %c0_5 = arith.constant 0 : index
    %c0_6 = arith.constant 0 : index
    %c0_7 = arith.constant 0 : index
    %5 = vector.load %arg3[%c0_4, %c0_5, %c0_6, %c0_7] : memref<1x2x32x128xf32, #tpu.memory_space<vmem>>, vector<1x1x32x128xf32>
    %6 = vector.shape_cast %5 : vector<1x1x32x128xf32> to vector<32x128xf32>
    %7 = arith.subf %4, %6 : vector<32x128xf32>
    %8 = arith.mulf %7, %7 : vector<32x128xf32>
    %9 = vector.shape_cast %8 : vector<32x128xf32> to vector<4x8x128xf32>
    %cst = arith.constant dense<0.000000e+00> : vector<8x128xf32>
    %10 = vector.multi_reduction <add>, %9, %cst [0] : vector<4x8x128xf32> to vector<8x128xf32>
    %c0_8 = arith.constant 0 : index
    %c1 = arith.constant 1 : index
    %c0_9 = arith.constant 0 : index
    %c0_10 = arith.constant 0 : index
    %11 = vector.load %arg3[%c0_8, %c1, %c0_9, %c0_10] : memref<1x2x32x128xf32, #tpu.memory_space<vmem>>, vector<1x1x32x128xf32>
    %12 = vector.shape_cast %11 : vector<1x1x32x128xf32> to vector<32x128xf32>
    %13 = arith.subf %4, %12 : vector<32x128xf32>
    %14 = arith.mulf %13, %13 : vector<32x128xf32>
    %15 = vector.shape_cast %14 : vector<32x128xf32> to vector<4x8x128xf32>
    %cst_11 = arith.constant dense<0.000000e+00> : vector<8x128xf32>
    %16 = vector.multi_reduction <add>, %15, %cst_11 [0] : vector<4x8x128xf32> to vector<8x128xf32>
    %17 = vector.shape_cast %10 : vector<8x128xf32> to vector<1x8x128xf32>
    %18 = vector.shape_cast %16 : vector<8x128xf32> to vector<1x8x128xf32>
    %19 = tpu.concatenate %17, %18 in 0 : vector<1x8x128xf32>, vector<1x8x128xf32> -> vector<2x8x128xf32>
    %c0_12 = arith.constant 0 : index
    %c1_13 = arith.constant 1 : index
    %c0_14 = arith.constant 0 : index
    %c0_15 = arith.constant 0 : index
    %20 = vector.load %arg2[%c0_12, %c1_13, %c0_14, %c0_15] : memref<1x2x32x128xf32, #tpu.memory_space<vmem>>, vector<1x1x32x128xf32>
    %21 = vector.shape_cast %20 : vector<1x1x32x128xf32> to vector<32x128xf32>
    %c0_16 = arith.constant 0 : index
    %c0_17 = arith.constant 0 : index
    %c0_18 = arith.constant 0 : index
    %c0_19 = arith.constant 0 : index
    %22 = vector.load %arg3[%c0_16, %c0_17, %c0_18, %c0_19] : memref<1x2x32x128xf32, #tpu.memory_space<vmem>>, vector<1x1x32x128xf32>
    %23 = vector.shape_cast %22 : vector<1x1x32x128xf32> to vector<32x128xf32>
    %24 = arith.subf %21, %23 : vector<32x128xf32>
    %25 = arith.mulf %24, %24 : vector<32x128xf32>
    %26 = vector.shape_cast %25 : vector<32x128xf32> to vector<4x8x128xf32>
    %cst_20 = arith.constant dense<0.000000e+00> : vector<8x128xf32>
    %27 = vector.multi_reduction <add>, %26, %cst_20 [0] : vector<4x8x128xf32> to vector<8x128xf32>
    %c0_21 = arith.constant 0 : index
    %c1_22 = arith.constant 1 : index
    %c0_23 = arith.constant 0 : index
    %c0_24 = arith.constant 0 : index
    %28 = vector.load %arg3[%c0_21, %c1_22, %c0_23, %c0_24] : memref<1x2x32x128xf32, #tpu.memory_space<vmem>>, vector<1x1x32x128xf32>
    %29 = vector.shape_cast %28 : vector<1x1x32x128xf32> to vector<32x128xf32>
    %30 = arith.subf %21, %29 : vector<32x128xf32>
    %31 = arith.mulf %30, %30 : vector<32x128xf32>
    %32 = vector.shape_cast %31 : vector<32x128xf32> to vector<4x8x128xf32>
    %cst_25 = arith.constant dense<0.000000e+00> : vector<8x128xf32>
    %33 = vector.multi_reduction <add>, %32, %cst_25 [0] : vector<4x8x128xf32> to vector<8x128xf32>
    %34 = vector.shape_cast %27 : vector<8x128xf32> to vector<1x8x128xf32>
    %35 = vector.shape_cast %33 : vector<8x128xf32> to vector<1x8x128xf32>
    %36 = tpu.concatenate %34, %35 in 0 : vector<1x8x128xf32>, vector<1x8x128xf32> -> vector<2x8x128xf32>
    %c0_26 = arith.constant 0 : index
    %c0_27 = arith.constant 0 : index
    %c0_28 = arith.constant 0 : index
    %c0_29 = arith.constant 0 : index
    %37 = vector.load %arg5[%c0_26, %c0_27, %c0_28, %c0_29] : memref<2x2x8x128xf32, #tpu.memory_space<vmem>>, vector<2x2x8x128xf32>
    %38 = vector.shape_cast %19 : vector<2x8x128xf32> to vector<1x2x8x128xf32>
    %39 = vector.shape_cast %36 : vector<2x8x128xf32> to vector<1x2x8x128xf32>
    %40 = tpu.concatenate %38, %39 in 0 : vector<1x2x8x128xf32>, vector<1x2x8x128xf32> -> vector<2x2x8x128xf32>
    %41 = arith.addf %37, %40 : vector<2x2x8x128xf32>
    %c0_30 = arith.constant 0 : index
    %c0_31 = arith.constant 0 : index
    %c0_32 = arith.constant 0 : index
    %c0_33 = arith.constant 0 : index
    %42 = vector.load %arg5[%c0_30, %c0_31, %c0_32, %c0_33] : memref<2x2x8x128xf32, #tpu.memory_space<vmem>>, vector<2x2x8x128xf32>
    tpu.vector_store %arg5[%c0_30, %c0_31, %c0_32, %c0_33], %41 {strides = array<i32>} : memref<2x2x8x128xf32, #tpu.memory_space<vmem>>, vector<2x2x8x128xf32>,
    %c1_i32 = arith.constant 1 : i32
    %43 = arith.cmpi eq, %arg1, %c1_i32 : i32
    %44 = arith.extui %43 : i1 to i32
    %c0_i32_34 = arith.constant 0 : i32
    %45 = arith.cmpi ne, %44, %c0_i32_34 : i32
    scf.if %45 {
      %c0_35 = arith.constant 0 : index
      %c0_36 = arith.constant 0 : index
      %c0_37 = arith.constant 0 : index
      %c0_38 = arith.constant 0 : index
      %46 = vector.load %arg5[%c0_35, %c0_36, %c0_37, %c0_38] : memref<2x2x8x128xf32, #tpu.memory_space<vmem>>, vector<2x2x8x128xf32>
      %cst_39 = arith.constant dense<0.000000e+00> : vector<2x2x128xf32>
      %47 = vector.multi_reduction <add>, %46, %cst_39 [2] : vector<2x2x8x128xf32> to vector<2x2x128xf32>
      %cst_40 = arith.constant dense<0.000000e+00> : vector<2x2xf32>
      %48 = vector.multi_reduction <add>, %47, %cst_40 [2] : vector<2x2x128xf32> to vector<2x2xf32>
      %c0_41 = arith.constant 0 : index
      %c0_42 = arith.constant 0 : index
      %c0_43 = arith.constant 0 : index
      %49 = vector.load %arg4[%c0_41, %c0_42, %c0_43] : memref<1x2x2xf32, #tpu.memory_space<vmem>>, vector<1x2x2xf32>
      %50 = vector.shape_cast %49 : vector<1x2x2xf32> to vector<2x2xf32>
      %51 = vector.shape_cast %48 : vector<2x2xf32> to vector<1x2x2xf32>
      tpu.vector_store %arg4[%c0_41, %c0_42, %c0_43], %51 {strides = array<i32>} : memref<1x2x2xf32, #tpu.memory_space<vmem>>, vector<1x2x2xf32>,
    } else {
    }
    return
  }
  func.func @transform_0(%arg0: i32, %arg1: i32) -> (i32, i32, i32, i32) {
    %c0_i32 = arith.constant 0 : i32
    %c0_i32_0 = arith.constant 0 : i32
    %c0_i32_1 = arith.constant 0 : i32
    return %arg0, %c0_i32, %arg1, %c0_i32_0 : i32, i32, i32, i32
  }
  func.func @transform_1(%arg0: i32, %arg1: i32) -> (i32, i32, i32, i32) {
    %c0_i32 = arith.constant 0 : i32
    %c0_i32_0 = arith.constant 0 : i32
    %c0_i32_1 = arith.constant 0 : i32
    return %arg0, %c0_i32, %arg1, %c0_i32_0 : i32, i32, i32, i32
  }
  func.func @transform_2(%arg0: i32, %arg1: i32) -> (i32, i32, i32) {
    %c0_i32 = arith.constant 0 : i32
    %c0_i32_0 = arith.constant 0 : i32
    %c0_i32_1 = arith.constant 0 : i32
    return %arg0, %c0_i32, %c0_i32_0 : i32, i32, i32
  }
}

module attributes {stable_mosaic.version = 11 : i64} {
  func.func @_pairwise_ssd_kernel(%arg0: i32, %arg1: i32, %arg2: memref<1x2x32x128xf32, #tpu.memory_space<vmem>>, %arg3: memref<1x2x32x128xf32, #tpu.memory_space<vmem>>, %arg4: memref<1x2x2xf32, #tpu.memory_space<vmem>>, %arg5: memref<2x2x8x128xf32, #tpu.memory_space<vmem>>) attributes {dimension_semantics = [#tpu.dimension_semantics<parallel>, #tpu.dimension_semantics<arbitrary>], iteration_bounds = array<i64: 2, 1>, scalar_prefetch = 0 : i64, scratch_operands = 1 : i64, tpu.core_type = #tpu.core_type<tc>, window_params = [{transform_indices = @transform_0, window_bounds = array<i64: 1, 2, 32, 128>}, {transform_indices = @transform_1, window_bounds = array<i64: 1, 2, 32, 128>}, {transform_indices = @transform_2, window_bounds = array<i64: 1, 2, 2>}]} {
    %c0_i32 = arith.constant 0 : i32
    %0 = arith.cmpi eq, %arg1, %c0_i32 : i32
    %1 = arith.extui %0 : i1 to i32
    %c0_i32_0 = arith.constant 0 : i32
    %2 = arith.cmpi ne, %1, %c0_i32_0 : i32
    scf.if %2 {
      %cst_36 = arith.constant 0.000000e+00 : f32
      %46 = vector.broadcast %cst_36 : f32 to vector<2x2x8x128xf32>
      %c0_37 = arith.constant 0 : index
      %c0_38 = arith.constant 0 : index
      %c0_39 = arith.constant 0 : index
      %c0_40 = arith.constant 0 : index
      %47 = vector.load %arg5[%c0_37, %c0_38, %c0_39, %c0_40] : memref<2x2x8x128xf32, #tpu.memory_space<vmem>>, vector<2x2x8x128xf32>
      tpu.vector_store %arg5[%c0_37, %c0_38, %c0_39, %c0_40], %46 {strides = array<i32>} : memref<2x2x8x128xf32, #tpu.memory_space<vmem>>, vector<2x2x8x128xf32>,
    } else {
    }
    %c0 = arith.constant 0 : index
    %c0_1 = arith.constant 0 : index
    %c0_2 = arith.constant 0 : index
    %c0_3 = arith.constant 0 : index
    %3 = vector.load %arg2[%c0, %c0_1, %c0_2, %c0_3] : memref<1x2x32x128xf32, #tpu.memory_space<vmem>>, vector<1x1x32x128xf32>
    %4 = vector.shape_cast %3 : vector<1x1x32x128xf32> to vector<32x128xf32>
    %c0_4 = arith.constant 0 : index
    %c0_5 = arith.constant 0 : index
    %c0_6 = arith.constant 0 : index
    %c0_7 = arith.constant 0 : index
    %5 = vector.load %arg3[%c0_4, %c0_5, %c0_6, %c0_7] : memref<1x2x32x128xf32, #tpu.memory_space<vmem>>, vector<1x1x32x128xf32>
    %6 = vector.shape_cast %5 : vector<1x1x32x128xf32> to vector<32x128xf32>
    %7 = arith.subf %4, %6 : vector<32x128xf32>
    %8 = arith.mulf %7, %7 : vector<32x128xf32>
    %9 = vector.shape_cast %8 : vector<32x128xf32> to vector<4x8x128xf32>
    %cst = arith.constant dense<0.000000e+00> : vector<8x128xf32>
    %10 = vector.multi_reduction <add>, %9, %cst [0] : vector<4x8x128xf32> to vector<8x128xf32>
    %c0_8 = arith.constant 0 : index
    %c1 = arith.constant 1 : index
    %c0_9 = arith.constant 0 : index
    %c0_10 = arith.constant 0 : index
    %11 = vector.load %arg3[%c0_8, %c1, %c0_9, %c0_10] : memref<1x2x32x128xf32, #tpu.memory_space<vmem>>, vector<1x1x32x128xf32>
    %12 = vector.shape_cast %11 : vector<1x1x32x128xf32> to vector<32x128xf32>
    %13 = arith.subf %4, %12 : vector<32x128xf32>
    %14 = arith.mulf %13, %13 : vector<32x128xf32>
    %15 = vector.shape_cast %14 : vector<32x128xf32> to vector<4x8x128xf32>
    %cst_11 = arith.constant dense<0.000000e+00> : vector<8x128xf32>
    %16 = vector.multi_reduction <add>, %15, %cst_11 [0] : vector<4x8x128xf32> to vector<8x128xf32>
    %17 = vector.shape_cast %10 : vector<8x128xf32> to vector<1x8x128xf32>
    %18 = vector.shape_cast %16 : vector<8x128xf32> to vector<1x8x128xf32>
    %19 = tpu.concatenate %17, %18 in 0 : vector<1x8x128xf32>, vector<1x8x128xf32> -> vector<2x8x128xf32>
    %c0_12 = arith.constant 0 : index
    %c1_13 = arith.constant 1 : index
    %c0_14 = arith.constant 0 : index
    %c0_15 = arith.constant 0 : index
    %20 = vector.load %arg2[%c0_12, %c1_13, %c0_14, %c0_15] : memref<1x2x32x128xf32, #tpu.memory_space<vmem>>, vector<1x1x32x128xf32>
    %21 = vector.shape_cast %20 : vector<1x1x32x128xf32> to vector<32x128xf32>
    %c0_16 = arith.constant 0 : index
    %c0_17 = arith.constant 0 : index
    %c0_18 = arith.constant 0 : index
    %c0_19 = arith.constant 0 : index
    %22 = vector.load %arg3[%c0_16, %c0_17, %c0_18, %c0_19] : memref<1x2x32x128xf32, #tpu.memory_space<vmem>>, vector<1x1x32x128xf32>
    %23 = vector.shape_cast %22 : vector<1x1x32x128xf32> to vector<32x128xf32>
    %24 = arith.subf %21, %23 : vector<32x128xf32>
    %25 = arith.mulf %24, %24 : vector<32x128xf32>
    %26 = vector.shape_cast %25 : vector<32x128xf32> to vector<4x8x128xf32>
    %cst_20 = arith.constant dense<0.000000e+00> : vector<8x128xf32>
    %27 = vector.multi_reduction <add>, %26, %cst_20 [0] : vector<4x8x128xf32> to vector<8x128xf32>
    %c0_21 = arith.constant 0 : index
    %c1_22 = arith.constant 1 : index
    %c0_23 = arith.constant 0 : index
    %c0_24 = arith.constant 0 : index
    %28 = vector.load %arg3[%c0_21, %c1_22, %c0_23, %c0_24] : memref<1x2x32x128xf32, #tpu.memory_space<vmem>>, vector<1x1x32x128xf32>
    %29 = vector.shape_cast %28 : vector<1x1x32x128xf32> to vector<32x128xf32>
    %30 = arith.subf %21, %29 : vector<32x128xf32>
    %31 = arith.mulf %30, %30 : vector<32x128xf32>
    %32 = vector.shape_cast %31 : vector<32x128xf32> to vector<4x8x128xf32>
    %cst_25 = arith.constant dense<0.000000e+00> : vector<8x128xf32>
    %33 = vector.multi_reduction <add>, %32, %cst_25 [0] : vector<4x8x128xf32> to vector<8x128xf32>
    %34 = vector.shape_cast %27 : vector<8x128xf32> to vector<1x8x128xf32>
    %35 = vector.shape_cast %33 : vector<8x128xf32> to vector<1x8x128xf32>
    %36 = tpu.concatenate %34, %35 in 0 : vector<1x8x128xf32>, vector<1x8x128xf32> -> vector<2x8x128xf32>
    %c0_26 = arith.constant 0 : index
    %c0_27 = arith.constant 0 : index
    %c0_28 = arith.constant 0 : index
    %c0_29 = arith.constant 0 : index
    %37 = vector.load %arg5[%c0_26, %c0_27, %c0_28, %c0_29] : memref<2x2x8x128xf32, #tpu.memory_space<vmem>>, vector<2x2x8x128xf32>
    %38 = vector.shape_cast %19 : vector<2x8x128xf32> to vector<1x2x8x128xf32>
    %39 = vector.shape_cast %36 : vector<2x8x128xf32> to vector<1x2x8x128xf32>
    %40 = tpu.concatenate %38, %39 in 0 : vector<1x2x8x128xf32>, vector<1x2x8x128xf32> -> vector<2x2x8x128xf32>
    %41 = arith.addf %37, %40 : vector<2x2x8x128xf32>
    %c0_30 = arith.constant 0 : index
    %c0_31 = arith.constant 0 : index
    %c0_32 = arith.constant 0 : index
    %c0_33 = arith.constant 0 : index
    %42 = vector.load %arg5[%c0_30, %c0_31, %c0_32, %c0_33] : memref<2x2x8x128xf32, #tpu.memory_space<vmem>>, vector<2x2x8x128xf32>
    tpu.vector_store %arg5[%c0_30, %c0_31, %c0_32, %c0_33], %41 {strides = array<i32>} : memref<2x2x8x128xf32, #tpu.memory_space<vmem>>, vector<2x2x8x128xf32>,
    %c0_i32_34 = arith.constant 0 : i32
    %43 = arith.cmpi eq, %arg1, %c0_i32_34 : i32
    %44 = arith.extui %43 : i1 to i32
    %c0_i32_35 = arith.constant 0 : i32
    %45 = arith.cmpi ne, %44, %c0_i32_35 : i32
    scf.if %45 {
      %c0_36 = arith.constant 0 : index
      %c0_37 = arith.constant 0 : index
      %c0_38 = arith.constant 0 : index
      %c0_39 = arith.constant 0 : index
      %46 = vector.load %arg5[%c0_36, %c0_37, %c0_38, %c0_39] : memref<2x2x8x128xf32, #tpu.memory_space<vmem>>, vector<2x2x8x128xf32>
      %cst_40 = arith.constant dense<0.000000e+00> : vector<2x2x128xf32>
      %47 = vector.multi_reduction <add>, %46, %cst_40 [2] : vector<2x2x8x128xf32> to vector<2x2x128xf32>
      %cst_41 = arith.constant dense<0.000000e+00> : vector<2x2xf32>
      %48 = vector.multi_reduction <add>, %47, %cst_41 [2] : vector<2x2x128xf32> to vector<2x2xf32>
      %c0_42 = arith.constant 0 : index
      %c0_43 = arith.constant 0 : index
      %c0_44 = arith.constant 0 : index
      %49 = vector.load %arg4[%c0_42, %c0_43, %c0_44] : memref<1x2x2xf32, #tpu.memory_space<vmem>>, vector<1x2x2xf32>
      %50 = vector.shape_cast %49 : vector<1x2x2xf32> to vector<2x2xf32>
      %51 = vector.shape_cast %48 : vector<2x2xf32> to vector<1x2x2xf32>
      tpu.vector_store %arg4[%c0_42, %c0_43, %c0_44], %51 {strides = array<i32>} : memref<1x2x2xf32, #tpu.memory_space<vmem>>, vector<1x2x2xf32>,
    } else {
    }
    return
  }
  func.func @transform_0(%arg0: i32, %arg1: i32) -> (i32, i32, i32, i32) {
    %c0_i32 = arith.constant 0 : i32
    %c0_i32_0 = arith.constant 0 : i32
    %c0_i32_1 = arith.constant 0 : i32
    return %arg0, %c0_i32, %arg1, %c0_i32_0 : i32, i32, i32, i32
  }
  func.func @transform_1(%arg0: i32, %arg1: i32) -> (i32, i32, i32, i32) {
    %c0_i32 = arith.constant 0 : i32
    %c0_i32_0 = arith.constant 0 : i32
    %c0_i32_1 = arith.constant 0 : i32
    return %arg0, %c0_i32, %arg1, %c0_i32_0 : i32, i32, i32, i32
  }
  func.func @transform_2(%arg0: i32, %arg1: i32) -> (i32, i32, i32) {
    %c0_i32 = arith.constant 0 : i32
    %c0_i32_0 = arith.constant 0 : i32
    %c0_i32_1 = arith.constant 0 : i32
    return %arg0, %c0_i32, %c0_i32_0 : i32, i32, i32
  }
}

module attributes {stable_mosaic.version = 11 : i64} {
  func.func @_pairwise_ssd_kernel(%arg0: i32, %arg1: i32, %arg2: memref<1x2x16x128xf32, #tpu.memory_space<vmem>>, %arg3: memref<1x2x16x128xf32, #tpu.memory_space<vmem>>, %arg4: memref<1x2x2xf32, #tpu.memory_space<vmem>>, %arg5: memref<2x2x8x128xf32, #tpu.memory_space<vmem>>) attributes {dimension_semantics = [#tpu.dimension_semantics<parallel>, #tpu.dimension_semantics<arbitrary>], iteration_bounds = array<i64: 3, 1>, scalar_prefetch = 0 : i64, scratch_operands = 1 : i64, tpu.core_type = #tpu.core_type<tc>, window_params = [{transform_indices = @transform_0, window_bounds = array<i64: 1, 2, 16, 128>}, {transform_indices = @transform_1, window_bounds = array<i64: 1, 2, 16, 128>}, {transform_indices = @transform_2, window_bounds = array<i64: 1, 2, 2>}]} {
    %c0_i32 = arith.constant 0 : i32
    %0 = arith.cmpi eq, %arg1, %c0_i32 : i32
    %1 = arith.extui %0 : i1 to i32
    %c0_i32_0 = arith.constant 0 : i32
    %2 = arith.cmpi ne, %1, %c0_i32_0 : i32
    scf.if %2 {
      %cst_36 = arith.constant 0.000000e+00 : f32
      %46 = vector.broadcast %cst_36 : f32 to vector<2x2x8x128xf32>
      %c0_37 = arith.constant 0 : index
      %c0_38 = arith.constant 0 : index
      %c0_39 = arith.constant 0 : index
      %c0_40 = arith.constant 0 : index
      %47 = vector.load %arg5[%c0_37, %c0_38, %c0_39, %c0_40] : memref<2x2x8x128xf32, #tpu.memory_space<vmem>>, vector<2x2x8x128xf32>
      tpu.vector_store %arg5[%c0_37, %c0_38, %c0_39, %c0_40], %46 {strides = array<i32>} : memref<2x2x8x128xf32, #tpu.memory_space<vmem>>, vector<2x2x8x128xf32>,
    } else {
    }
    %c0 = arith.constant 0 : index
    %c0_1 = arith.constant 0 : index
    %c0_2 = arith.constant 0 : index
    %c0_3 = arith.constant 0 : index
    %3 = vector.load %arg2[%c0, %c0_1, %c0_2, %c0_3] : memref<1x2x16x128xf32, #tpu.memory_space<vmem>>, vector<1x1x16x128xf32>
    %4 = vector.shape_cast %3 : vector<1x1x16x128xf32> to vector<16x128xf32>
    %c0_4 = arith.constant 0 : index
    %c0_5 = arith.constant 0 : index
    %c0_6 = arith.constant 0 : index
    %c0_7 = arith.constant 0 : index
    %5 = vector.load %arg3[%c0_4, %c0_5, %c0_6, %c0_7] : memref<1x2x16x128xf32, #tpu.memory_space<vmem>>, vector<1x1x16x128xf32>
    %6 = vector.shape_cast %5 : vector<1x1x16x128xf32> to vector<16x128xf32>
    %7 = arith.subf %4, %6 : vector<16x128xf32>
    %8 = arith.mulf %7, %7 : vector<16x128xf32>
    %9 = vector.shape_cast %8 : vector<16x128xf32> to vector<2x8x128xf32>
    %cst = arith.constant dense<0.000000e+00> : vector<8x128xf32>
    %10 = vector.multi_reduction <add>, %9, %cst [0] : vector<2x8x128xf32> to vector<8x128xf32>
    %c0_8 = arith.constant 0 : index
    %c1 = arith.constant 1 : index
    %c0_9 = arith.constant 0 : index
    %c0_10 = arith.constant 0 : index
    %11 = vector.load %arg3[%c0_8, %c1, %c0_9, %c0_10] : memref<1x2x16x128xf32, #tpu.memory_space<vmem>>, vector<1x1x16x128xf32>
    %12 = vector.shape_cast %11 : vector<1x1x16x128xf32> to vector<16x128xf32>
    %13 = arith.subf %4, %12 : vector<16x128xf32>
    %14 = arith.mulf %13, %13 : vector<16x128xf32>
    %15 = vector.shape_cast %14 : vector<16x128xf32> to vector<2x8x128xf32>
    %cst_11 = arith.constant dense<0.000000e+00> : vector<8x128xf32>
    %16 = vector.multi_reduction <add>, %15, %cst_11 [0] : vector<2x8x128xf32> to vector<8x128xf32>
    %17 = vector.shape_cast %10 : vector<8x128xf32> to vector<1x8x128xf32>
    %18 = vector.shape_cast %16 : vector<8x128xf32> to vector<1x8x128xf32>
    %19 = tpu.concatenate %17, %18 in 0 : vector<1x8x128xf32>, vector<1x8x128xf32> -> vector<2x8x128xf32>
    %c0_12 = arith.constant 0 : index
    %c1_13 = arith.constant 1 : index
    %c0_14 = arith.constant 0 : index
    %c0_15 = arith.constant 0 : index
    %20 = vector.load %arg2[%c0_12, %c1_13, %c0_14, %c0_15] : memref<1x2x16x128xf32, #tpu.memory_space<vmem>>, vector<1x1x16x128xf32>
    %21 = vector.shape_cast %20 : vector<1x1x16x128xf32> to vector<16x128xf32>
    %c0_16 = arith.constant 0 : index
    %c0_17 = arith.constant 0 : index
    %c0_18 = arith.constant 0 : index
    %c0_19 = arith.constant 0 : index
    %22 = vector.load %arg3[%c0_16, %c0_17, %c0_18, %c0_19] : memref<1x2x16x128xf32, #tpu.memory_space<vmem>>, vector<1x1x16x128xf32>
    %23 = vector.shape_cast %22 : vector<1x1x16x128xf32> to vector<16x128xf32>
    %24 = arith.subf %21, %23 : vector<16x128xf32>
    %25 = arith.mulf %24, %24 : vector<16x128xf32>
    %26 = vector.shape_cast %25 : vector<16x128xf32> to vector<2x8x128xf32>
    %cst_20 = arith.constant dense<0.000000e+00> : vector<8x128xf32>
    %27 = vector.multi_reduction <add>, %26, %cst_20 [0] : vector<2x8x128xf32> to vector<8x128xf32>
    %c0_21 = arith.constant 0 : index
    %c1_22 = arith.constant 1 : index
    %c0_23 = arith.constant 0 : index
    %c0_24 = arith.constant 0 : index
    %28 = vector.load %arg3[%c0_21, %c1_22, %c0_23, %c0_24] : memref<1x2x16x128xf32, #tpu.memory_space<vmem>>, vector<1x1x16x128xf32>
    %29 = vector.shape_cast %28 : vector<1x1x16x128xf32> to vector<16x128xf32>
    %30 = arith.subf %21, %29 : vector<16x128xf32>
    %31 = arith.mulf %30, %30 : vector<16x128xf32>
    %32 = vector.shape_cast %31 : vector<16x128xf32> to vector<2x8x128xf32>
    %cst_25 = arith.constant dense<0.000000e+00> : vector<8x128xf32>
    %33 = vector.multi_reduction <add>, %32, %cst_25 [0] : vector<2x8x128xf32> to vector<8x128xf32>
    %34 = vector.shape_cast %27 : vector<8x128xf32> to vector<1x8x128xf32>
    %35 = vector.shape_cast %33 : vector<8x128xf32> to vector<1x8x128xf32>
    %36 = tpu.concatenate %34, %35 in 0 : vector<1x8x128xf32>, vector<1x8x128xf32> -> vector<2x8x128xf32>
    %c0_26 = arith.constant 0 : index
    %c0_27 = arith.constant 0 : index
    %c0_28 = arith.constant 0 : index
    %c0_29 = arith.constant 0 : index
    %37 = vector.load %arg5[%c0_26, %c0_27, %c0_28, %c0_29] : memref<2x2x8x128xf32, #tpu.memory_space<vmem>>, vector<2x2x8x128xf32>
    %38 = vector.shape_cast %19 : vector<2x8x128xf32> to vector<1x2x8x128xf32>
    %39 = vector.shape_cast %36 : vector<2x8x128xf32> to vector<1x2x8x128xf32>
    %40 = tpu.concatenate %38, %39 in 0 : vector<1x2x8x128xf32>, vector<1x2x8x128xf32> -> vector<2x2x8x128xf32>
    %41 = arith.addf %37, %40 : vector<2x2x8x128xf32>
    %c0_30 = arith.constant 0 : index
    %c0_31 = arith.constant 0 : index
    %c0_32 = arith.constant 0 : index
    %c0_33 = arith.constant 0 : index
    %42 = vector.load %arg5[%c0_30, %c0_31, %c0_32, %c0_33] : memref<2x2x8x128xf32, #tpu.memory_space<vmem>>, vector<2x2x8x128xf32>
    tpu.vector_store %arg5[%c0_30, %c0_31, %c0_32, %c0_33], %41 {strides = array<i32>} : memref<2x2x8x128xf32, #tpu.memory_space<vmem>>, vector<2x2x8x128xf32>,
    %c0_i32_34 = arith.constant 0 : i32
    %43 = arith.cmpi eq, %arg1, %c0_i32_34 : i32
    %44 = arith.extui %43 : i1 to i32
    %c0_i32_35 = arith.constant 0 : i32
    %45 = arith.cmpi ne, %44, %c0_i32_35 : i32
    scf.if %45 {
      %c0_36 = arith.constant 0 : index
      %c0_37 = arith.constant 0 : index
      %c0_38 = arith.constant 0 : index
      %c0_39 = arith.constant 0 : index
      %46 = vector.load %arg5[%c0_36, %c0_37, %c0_38, %c0_39] : memref<2x2x8x128xf32, #tpu.memory_space<vmem>>, vector<2x2x8x128xf32>
      %cst_40 = arith.constant dense<0.000000e+00> : vector<2x2x128xf32>
      %47 = vector.multi_reduction <add>, %46, %cst_40 [2] : vector<2x2x8x128xf32> to vector<2x2x128xf32>
      %cst_41 = arith.constant dense<0.000000e+00> : vector<2x2xf32>
      %48 = vector.multi_reduction <add>, %47, %cst_41 [2] : vector<2x2x128xf32> to vector<2x2xf32>
      %c0_42 = arith.constant 0 : index
      %c0_43 = arith.constant 0 : index
      %c0_44 = arith.constant 0 : index
      %49 = vector.load %arg4[%c0_42, %c0_43, %c0_44] : memref<1x2x2xf32, #tpu.memory_space<vmem>>, vector<1x2x2xf32>
      %50 = vector.shape_cast %49 : vector<1x2x2xf32> to vector<2x2xf32>
      %51 = vector.shape_cast %48 : vector<2x2xf32> to vector<1x2x2xf32>
      tpu.vector_store %arg4[%c0_42, %c0_43, %c0_44], %51 {strides = array<i32>} : memref<1x2x2xf32, #tpu.memory_space<vmem>>, vector<1x2x2xf32>,
    } else {
    }
    return
  }
  func.func @transform_0(%arg0: i32, %arg1: i32) -> (i32, i32, i32, i32) {
    %c0_i32 = arith.constant 0 : i32
    %c0_i32_0 = arith.constant 0 : i32
    %c0_i32_1 = arith.constant 0 : i32
    return %arg0, %c0_i32, %arg1, %c0_i32_0 : i32, i32, i32, i32
  }
  func.func @transform_1(%arg0: i32, %arg1: i32) -> (i32, i32, i32, i32) {
    %c0_i32 = arith.constant 0 : i32
    %c0_i32_0 = arith.constant 0 : i32
    %c0_i32_1 = arith.constant 0 : i32
    return %arg0, %c0_i32, %arg1, %c0_i32_0 : i32, i32, i32, i32
  }
  func.func @transform_2(%arg0: i32, %arg1: i32) -> (i32, i32, i32) {
    %c0_i32 = arith.constant 0 : i32
    %c0_i32_0 = arith.constant 0 : i32
    %c0_i32_1 = arith.constant 0 : i32
    return %arg0, %c0_i32, %c0_i32_0 : i32, i32, i32
  }
}

module attributes {stable_mosaic.version = 11 : i64} {
  func.func @_pairwise_ssd_kernel(%arg0: i32, %arg1: i32, %arg2: memref<1x2x8x128xf32, #tpu.memory_space<vmem>>, %arg3: memref<1x2x8x128xf32, #tpu.memory_space<vmem>>, %arg4: memref<1x2x2xf32, #tpu.memory_space<vmem>>, %arg5: memref<2x2x8x128xf32, #tpu.memory_space<vmem>>) attributes {dimension_semantics = [#tpu.dimension_semantics<parallel>, #tpu.dimension_semantics<arbitrary>], iteration_bounds = array<i64: 1, 1>, scalar_prefetch = 0 : i64, scratch_operands = 1 : i64, tpu.core_type = #tpu.core_type<tc>, window_params = [{transform_indices = @transform_0, window_bounds = array<i64: 1, 2, 8, 128>}, {transform_indices = @transform_1, window_bounds = array<i64: 1, 2, 8, 128>}, {transform_indices = @transform_2, window_bounds = array<i64: 1, 2, 2>}]} {
    %c0_i32 = arith.constant 0 : i32
    %0 = arith.cmpi eq, %arg1, %c0_i32 : i32
    %1 = arith.extui %0 : i1 to i32
    %c0_i32_0 = arith.constant 0 : i32
    %2 = arith.cmpi ne, %1, %c0_i32_0 : i32
    scf.if %2 {
      %cst_36 = arith.constant 0.000000e+00 : f32
      %46 = vector.broadcast %cst_36 : f32 to vector<2x2x8x128xf32>
      %c0_37 = arith.constant 0 : index
      %c0_38 = arith.constant 0 : index
      %c0_39 = arith.constant 0 : index
      %c0_40 = arith.constant 0 : index
      %47 = vector.load %arg5[%c0_37, %c0_38, %c0_39, %c0_40] : memref<2x2x8x128xf32, #tpu.memory_space<vmem>>, vector<2x2x8x128xf32>
      tpu.vector_store %arg5[%c0_37, %c0_38, %c0_39, %c0_40], %46 {strides = array<i32>} : memref<2x2x8x128xf32, #tpu.memory_space<vmem>>, vector<2x2x8x128xf32>,
    } else {
    }
    %c0 = arith.constant 0 : index
    %c0_1 = arith.constant 0 : index
    %c0_2 = arith.constant 0 : index
    %c0_3 = arith.constant 0 : index
    %3 = vector.load %arg2[%c0, %c0_1, %c0_2, %c0_3] : memref<1x2x8x128xf32, #tpu.memory_space<vmem>>, vector<1x1x8x128xf32>
    %4 = vector.shape_cast %3 : vector<1x1x8x128xf32> to vector<8x128xf32>
    %c0_4 = arith.constant 0 : index
    %c0_5 = arith.constant 0 : index
    %c0_6 = arith.constant 0 : index
    %c0_7 = arith.constant 0 : index
    %5 = vector.load %arg3[%c0_4, %c0_5, %c0_6, %c0_7] : memref<1x2x8x128xf32, #tpu.memory_space<vmem>>, vector<1x1x8x128xf32>
    %6 = vector.shape_cast %5 : vector<1x1x8x128xf32> to vector<8x128xf32>
    %7 = arith.subf %4, %6 : vector<8x128xf32>
    %8 = arith.mulf %7, %7 : vector<8x128xf32>
    %9 = vector.shape_cast %8 : vector<8x128xf32> to vector<1x8x128xf32>
    %cst = arith.constant dense<0.000000e+00> : vector<8x128xf32>
    %10 = vector.multi_reduction <add>, %9, %cst [0] : vector<1x8x128xf32> to vector<8x128xf32>
    %c0_8 = arith.constant 0 : index
    %c1 = arith.constant 1 : index
    %c0_9 = arith.constant 0 : index
    %c0_10 = arith.constant 0 : index
    %11 = vector.load %arg3[%c0_8, %c1, %c0_9, %c0_10] : memref<1x2x8x128xf32, #tpu.memory_space<vmem>>, vector<1x1x8x128xf32>
    %12 = vector.shape_cast %11 : vector<1x1x8x128xf32> to vector<8x128xf32>
    %13 = arith.subf %4, %12 : vector<8x128xf32>
    %14 = arith.mulf %13, %13 : vector<8x128xf32>
    %15 = vector.shape_cast %14 : vector<8x128xf32> to vector<1x8x128xf32>
    %cst_11 = arith.constant dense<0.000000e+00> : vector<8x128xf32>
    %16 = vector.multi_reduction <add>, %15, %cst_11 [0] : vector<1x8x128xf32> to vector<8x128xf32>
    %17 = vector.shape_cast %10 : vector<8x128xf32> to vector<1x8x128xf32>
    %18 = vector.shape_cast %16 : vector<8x128xf32> to vector<1x8x128xf32>
    %19 = tpu.concatenate %17, %18 in 0 : vector<1x8x128xf32>, vector<1x8x128xf32> -> vector<2x8x128xf32>
    %c0_12 = arith.constant 0 : index
    %c1_13 = arith.constant 1 : index
    %c0_14 = arith.constant 0 : index
    %c0_15 = arith.constant 0 : index
    %20 = vector.load %arg2[%c0_12, %c1_13, %c0_14, %c0_15] : memref<1x2x8x128xf32, #tpu.memory_space<vmem>>, vector<1x1x8x128xf32>
    %21 = vector.shape_cast %20 : vector<1x1x8x128xf32> to vector<8x128xf32>
    %c0_16 = arith.constant 0 : index
    %c0_17 = arith.constant 0 : index
    %c0_18 = arith.constant 0 : index
    %c0_19 = arith.constant 0 : index
    %22 = vector.load %arg3[%c0_16, %c0_17, %c0_18, %c0_19] : memref<1x2x8x128xf32, #tpu.memory_space<vmem>>, vector<1x1x8x128xf32>
    %23 = vector.shape_cast %22 : vector<1x1x8x128xf32> to vector<8x128xf32>
    %24 = arith.subf %21, %23 : vector<8x128xf32>
    %25 = arith.mulf %24, %24 : vector<8x128xf32>
    %26 = vector.shape_cast %25 : vector<8x128xf32> to vector<1x8x128xf32>
    %cst_20 = arith.constant dense<0.000000e+00> : vector<8x128xf32>
    %27 = vector.multi_reduction <add>, %26, %cst_20 [0] : vector<1x8x128xf32> to vector<8x128xf32>
    %c0_21 = arith.constant 0 : index
    %c1_22 = arith.constant 1 : index
    %c0_23 = arith.constant 0 : index
    %c0_24 = arith.constant 0 : index
    %28 = vector.load %arg3[%c0_21, %c1_22, %c0_23, %c0_24] : memref<1x2x8x128xf32, #tpu.memory_space<vmem>>, vector<1x1x8x128xf32>
    %29 = vector.shape_cast %28 : vector<1x1x8x128xf32> to vector<8x128xf32>
    %30 = arith.subf %21, %29 : vector<8x128xf32>
    %31 = arith.mulf %30, %30 : vector<8x128xf32>
    %32 = vector.shape_cast %31 : vector<8x128xf32> to vector<1x8x128xf32>
    %cst_25 = arith.constant dense<0.000000e+00> : vector<8x128xf32>
    %33 = vector.multi_reduction <add>, %32, %cst_25 [0] : vector<1x8x128xf32> to vector<8x128xf32>
    %34 = vector.shape_cast %27 : vector<8x128xf32> to vector<1x8x128xf32>
    %35 = vector.shape_cast %33 : vector<8x128xf32> to vector<1x8x128xf32>
    %36 = tpu.concatenate %34, %35 in 0 : vector<1x8x128xf32>, vector<1x8x128xf32> -> vector<2x8x128xf32>
    %c0_26 = arith.constant 0 : index
    %c0_27 = arith.constant 0 : index
    %c0_28 = arith.constant 0 : index
    %c0_29 = arith.constant 0 : index
    %37 = vector.load %arg5[%c0_26, %c0_27, %c0_28, %c0_29] : memref<2x2x8x128xf32, #tpu.memory_space<vmem>>, vector<2x2x8x128xf32>
    %38 = vector.shape_cast %19 : vector<2x8x128xf32> to vector<1x2x8x128xf32>
    %39 = vector.shape_cast %36 : vector<2x8x128xf32> to vector<1x2x8x128xf32>
    %40 = tpu.concatenate %38, %39 in 0 : vector<1x2x8x128xf32>, vector<1x2x8x128xf32> -> vector<2x2x8x128xf32>
    %41 = arith.addf %37, %40 : vector<2x2x8x128xf32>
    %c0_30 = arith.constant 0 : index
    %c0_31 = arith.constant 0 : index
    %c0_32 = arith.constant 0 : index
    %c0_33 = arith.constant 0 : index
    %42 = vector.load %arg5[%c0_30, %c0_31, %c0_32, %c0_33] : memref<2x2x8x128xf32, #tpu.memory_space<vmem>>, vector<2x2x8x128xf32>
    tpu.vector_store %arg5[%c0_30, %c0_31, %c0_32, %c0_33], %41 {strides = array<i32>} : memref<2x2x8x128xf32, #tpu.memory_space<vmem>>, vector<2x2x8x128xf32>,
    %c0_i32_34 = arith.constant 0 : i32
    %43 = arith.cmpi eq, %arg1, %c0_i32_34 : i32
    %44 = arith.extui %43 : i1 to i32
    %c0_i32_35 = arith.constant 0 : i32
    %45 = arith.cmpi ne, %44, %c0_i32_35 : i32
    scf.if %45 {
      %c0_36 = arith.constant 0 : index
      %c0_37 = arith.constant 0 : index
      %c0_38 = arith.constant 0 : index
      %c0_39 = arith.constant 0 : index
      %46 = vector.load %arg5[%c0_36, %c0_37, %c0_38, %c0_39] : memref<2x2x8x128xf32, #tpu.memory_space<vmem>>, vector<2x2x8x128xf32>
      %cst_40 = arith.constant dense<0.000000e+00> : vector<2x2x128xf32>
      %47 = vector.multi_reduction <add>, %46, %cst_40 [2] : vector<2x2x8x128xf32> to vector<2x2x128xf32>
      %cst_41 = arith.constant dense<0.000000e+00> : vector<2x2xf32>
      %48 = vector.multi_reduction <add>, %47, %cst_41 [2] : vector<2x2x128xf32> to vector<2x2xf32>
      %c0_42 = arith.constant 0 : index
      %c0_43 = arith.constant 0 : index
      %c0_44 = arith.constant 0 : index
      %49 = vector.load %arg4[%c0_42, %c0_43, %c0_44] : memref<1x2x2xf32, #tpu.memory_space<vmem>>, vector<1x2x2xf32>
      %50 = vector.shape_cast %49 : vector<1x2x2xf32> to vector<2x2xf32>
      %51 = vector.shape_cast %48 : vector<2x2xf32> to vector<1x2x2xf32>
      tpu.vector_store %arg4[%c0_42, %c0_43, %c0_44], %51 {strides = array<i32>} : memref<1x2x2xf32, #tpu.memory_space<vmem>>, vector<1x2x2xf32>,
    } else {
    }
    return
  }
  func.func @transform_0(%arg0: i32, %arg1: i32) -> (i32, i32, i32, i32) {
    %c0_i32 = arith.constant 0 : i32
    %c0_i32_0 = arith.constant 0 : i32
    %c0_i32_1 = arith.constant 0 : i32
    return %arg0, %c0_i32, %arg1, %c0_i32_0 : i32, i32, i32, i32
  }
  func.func @transform_1(%arg0: i32, %arg1: i32) -> (i32, i32, i32, i32) {
    %c0_i32 = arith.constant 0 : i32
    %c0_i32_0 = arith.constant 0 : i32
    %c0_i32_1 = arith.constant 0 : i32
    return %arg0, %c0_i32, %arg1, %c0_i32_0 : i32, i32, i32, i32
  }
  func.func @transform_2(%arg0: i32, %arg1: i32) -> (i32, i32, i32) {
    %c0_i32 = arith.constant 0 : i32
    %c0_i32_0 = arith.constant 0 : i32
    %c0_i32_1 = arith.constant 0 : i32
    return %arg0, %c0_i32, %c0_i32_0 : i32, i32, i32
  }
}

</mosaic_0001>

<llo_original>
// kernel: _efdm_loss_impl.5
$region0: #{_efdm_loss_impl.5}
  #allocation0 [shape = 'u32[]', space=smem, size = 0x4, offset = 0x4, fixed_abs, tag = 'smem constant byte address 0x4 - core index']
  #allocation1 [shape = 'u32[72,128]{1,0:T(1,128)}', space=vmem, size = 0x9000, scoped, tag = 'internal scratch']
  #allocation2 [shape = 'f32[2,2,8,128]{3,2,1,0:T(8,128)}', space=vmem, size = 0x4000, scoped, tag = 'scratch operand']
  %s0 = inlined_call_operand.vmem [shape: f32[2,2,128,128], index: 0, kind: input, shape index: {}]
  %s1 = inlined_call_operand.vmem [shape: f32[2,2,128,128], index: 1, kind: input, shape index: {}]
  %s2 = inlined_call_operand.vmem [shape: f32[2,2,2], index: 2, kind: output, shape index: {}]
  %s3 = sld [smem:[#allocation0]]
  $region125: #{_efdm_loss_impl.5} parent=0
    _
  %s5 = ssub.s32 1, %s3
  %s6 = scalar_select 0, %s5, %s3
  $region1: #{_efdm_loss_impl.5} parent=0
    #allocation3 [shape = 'u8[65536]{0}', space=vmem, size = 0x10000, scoped, tag = 'input window, operand 0']
    #allocation4 [shape = 'u8[65536]{0}', space=vmem, size = 0x10000, scoped, tag = 'input window, operand 1']
    loop: start=0, step=1, limit=10
    $region2: #{_efdm_loss_impl.5} parent=1 // loop_pre_header
      _
    $region3: #{_efdm_loss_impl.5} parent=1 // loop_header
      %s8 = sphi 0, %s12
      %p9 = scmp.ge.s32.totalorder %s8, 10
      %s15 = sphi 0, %s27
      %s16 = sphi 0, %s23
      %s17 = sphi 0, %s15
      %s18 = sphi 0, %s16
      %s19 = sphi 0, %s17
      %s20 = sphi 0, %s18
      %s32 = sphi 0, %s34
      %s35 = sphi 0, %s32
      %s36 = sphi 0, %s35
      %s52 = sphi 0, %s36
      %s60 = sphi 0, %s62
      %s63 = sphi 0, %s60
      %s64 = sphi 0, %s63
      %s80 = sphi 0, %s64
      %s86 = sphi 0, %s88
      %s89 = sphi 0, %s86
      %s90 = sphi 0, %s89
      %s106 = sphi 0, %s90
    $region4: #{_efdm_loss_impl.5} parent=1 // loop_header_branch
      %11 = sbr.rel (%p9) target = $region8
    $region5: #{_efdm_loss_impl.5} parent=1 // loop_body
      %s13 = ssub.s32 %s8, 1
      %s14 = ssub.s32 %s8, 2
      %s21 = sadd.s32 1, %s16
      %p22 = scmp.ge.s32.totalorder %s21, 4
      %s23 = scalar_select %p22, 0, %s21
      %s24 = sadd.s32 1, %s15
      %s25 = scalar_select %p22, %s24, %s15
      %p26 = scmp.ge.s32.totalorder %s25, 2
      %s27 = scalar_select %p26, 0, %s25
      %s28 = ssub.s32 %s15, %s27
      %s29 = ssub.s32 %s16, %s23
      %s30 = sor.u32 %s28, %s29
      %p31 = scmp.eq.s32.totalorder %s30, 0
      %s33 = sadd.s32 %s32, 1
      %s34 = scalar_select %p31, %s32, %s33
      %p37 = pneg %p31
      %p38 = scmp.eq.s32.totalorder %s8, 7
      %p39 = por %p37, %p38
      %p40 = scmp.ne.s32.totalorder %s32, %s35
      %p41 = scmp.eq.s32.totalorder %s8, 0
      %p42 = por %p40, %p41
      %p43 = scmp.ne.s32.totalorder %s32, %s35
      %p44 = scmp.eq.s32.totalorder %s13, 7
      %p45 = por %p43, %p44
      %p46 = scmp.ne.s32.totalorder %s35, %s36
      %p47 = scmp.eq.s32.totalorder %s13, 0
      %p48 = por %p46, %p47
      %p49 = scmp.ne.s32.totalorder %s35, %s36
      %p50 = scmp.eq.s32.totalorder %s14, 7
      %p51 = por %p49, %p50
      %p53 = scmp.ne.s32.totalorder %s36, %s52
      %p54 = scmp.eq.s32.totalorder %s14, 0
      %p55 = por %p53, %p54
      %s56 = ssub.s32 %s15, %s27
      %s57 = ssub.s32 %s16, %s23
      %s58 = sor.u32 %s56, %s57
      %p59 = scmp.eq.s32.totalorder %s58, 0
      %s61 = sadd.s32 %s60, 1
      %s62 = scalar_select %p59, %s60, %s61
      %p65 = pneg %p59
      %p66 = scmp.eq.s32.totalorder %s8, 7
      %p67 = por %p65, %p66
      %p68 = scmp.ne.s32.totalorder %s60, %s63
      %p69 = scmp.eq.s32.totalorder %s8, 0
      %p70 = por %p68, %p69
      %p71 = scmp.ne.s32.totalorder %s60, %s63
      %p72 = scmp.eq.s32.totalorder %s13, 7
      %p73 = por %p71, %p72
      %p74 = scmp.ne.s32.totalorder %s63, %s64
      %p75 = scmp.eq.s32.totalorder %s13, 0
      %p76 = por %p74, %p75
      %p77 = scmp.ne.s32.totalorder %s63, %s64
      %p78 = scmp.eq.s32.totalorder %s14, 7
      %p79 = por %p77, %p78
      %p81 = scmp.ne.s32.totalorder %s64, %s80
      %p82 = scmp.eq.s32.totalorder %s14, 0
      %p83 = por %p81, %p82
      %s84 = ssub.s32 %s15, %s27
      %p85 = scmp.eq.s32.totalorder %s84, 0
      %s87 = sadd.s32 %s86, 1
      %s88 = scalar_select %p85, %s86, %s87
      %p91 = pneg %p85
      %p92 = scmp.eq.s32.totalorder %s8, 7
      %p93 = por %p91, %p92
      %p94 = scmp.ne.s32.totalorder %s86, %s89
      %p95 = scmp.eq.s32.totalorder %s8, 0
      %p96 = por %p94, %p95
      %p97 = scmp.ne.s32.totalorder %s86, %s89
      %p98 = scmp.eq.s32.totalorder %s13, 7
      %p99 = por %p97, %p98
      %p100 = scmp.ne.s32.totalorder %s89, %s90
      %p101 = scmp.eq.s32.totalorder %s13, 0
      %p102 = por %p100, %p101
      %p103 = scmp.ne.s32.totalorder %s89, %s90
      %p104 = scmp.eq.s32.totalorder %s14, 7
      %p105 = por %p103, %p104
      %p107 = scmp.ne.s32.totalorder %s90, %s106
      %p108 = scmp.eq.s32.totalorder %s14, 0
      %p109 = por %p107, %p108
      %p110 = scmp.le.s32.totalorder 1, %s8
      %p111 = scmp.lt.s32.totalorder %s8, 9
      %p112 = pnand %p110, %p111
      %p113 = pneg %p112
      // Predicated region
      $region9: #{_efdm_loss_impl.5} parent=5 // pred_check
        _
      $region10: #{_efdm_loss_impl.5} parent=5 // pred_check_branch
        %115 = sbr.rel (%p112) target = $region12
      $region11: #{_efdm_loss_impl.5} parent=5 // pred_region
        %s116 = ssub.s32 %s8, 1
      $region12: #{_efdm_loss_impl.5} parent=5 // pred_fallthru
        _
      %p117 = scmp.lt.s32.totalorder %s8, 8
      // Predicated region
      $region13: #{_efdm_loss_impl.5} parent=5 // pred_check
        %p118 = pneg %p117
      $region14: #{_efdm_loss_impl.5} parent=5 // pred_check_branch
        %120 = sbr.rel (%p118) target = $region16
      $region15: #{_efdm_loss_impl.5} parent=5 // pred_region
        // Predicated region
        $region17: #{_efdm_loss_impl.5} parent=15 // pred_check
          %p121 = pneg %p42
        $region18: #{_efdm_loss_impl.5} parent=15 // pred_check_branch
          %123 = sbr.rel (%p121) target = $region20
        $region19: #{_efdm_loss_impl.5} parent=15 // pred_region
          %s124 = sand.u32 %s32, 1
          %s125 = sand.u32 %s32, 1
          %s126 = smul.addr %s125, 64
          %s127 = scalar_lea.vmem [#allocation3], %s126
          %s128 = smul.u32 4, %s16
          %s129 = smul.addr %s15, 32
          %s130 = sadd.s32 %s128, %s129
          %s131 = smul.addr %s130, 8
          %s132 = scalar_lea.vmem %s0, %s131
          // Predicated region
          $region21: #{_efdm_loss_impl.5} parent=19 // pred_check
            _
          $region22: #{_efdm_loss_impl.5} parent=19 // pred_check_branch
            %134 = sbr.rel (0) target = $region24
          $region23: #{_efdm_loss_impl.5} parent=19 // pred_region
            // Predicated region
            $region25: #{_efdm_loss_impl.5} parent=23 // pred_check
              _
            $region26: #{_efdm_loss_impl.5} parent=23 // pred_check_branch
              %136 = sbr.rel (0) target = $region28
            $region27: #{_efdm_loss_impl.5} parent=23 // pred_region
              // Predicated region
              $region40: #{_efdm_loss_impl.5} parent=27 // pred_check
                _
              $region41: #{_efdm_loss_impl.5} parent=27 // pred_check_branch
                %166 = sbr.rel (0) target = $region43
              $region42: #{_efdm_loss_impl.5} parent=27 // pred_region
                loop: start=0, step=1, limit=1
                $region44: #{_efdm_loss_impl.5} parent=42 // loop_pre_header
                  _
                $region45: #{_efdm_loss_impl.5} parent=42 // loop_header
                  %s168 = sphi 0, %s172
                  %p169 = scmp.ge.s32.totalorder %s168, 1
                  %s173 = sphi %s132, %s132
                  %s174 = sphi %s127, %s127
                $region46: #{_efdm_loss_impl.5} parent=42 // loop_header_branch
                  %171 = sbr.rel (%p169) target = $region50
                $region47: #{_efdm_loss_impl.5} parent=42 // loop_body
                  %v175 = vld [vmem:[%s173] sm:$0xff]
                  %176 = vst [vmem:[%s174] sm:$0xff] %v175
                  %v177 = vld [vmem:[%s173 + $0x8] sm:$0xff]
                  %178 = vst [vmem:[%s174 + $0x8] sm:$0xff] %v177
                  %v179 = vld [vmem:[%s173 + $0x10] sm:$0xff]
                  %180 = vst [vmem:[%s174 + $0x10] sm:$0xff] %v179
                  %v181 = vld [vmem:[%s173 + $0x18] sm:$0xff]
                  %182 = vst [vmem:[%s174 + $0x18] sm:$0xff] %v181
                  %v183 = vld [vmem:[%s173 + $0x80] sm:$0xff]
                  %184 = vst [vmem:[%s174 + $0x20] sm:$0xff] %v183
                  %v185 = vld [vmem:[%s173 + $0x88] sm:$0xff]
                  %186 = vst [vmem:[%s174 + $0x28] sm:$0xff] %v185
                  %v187 = vld [vmem:[%s173 + $0x90] sm:$0xff]
                  %188 = vst [vmem:[%s174 + $0x30] sm:$0xff] %v187
                  %v189 = vld [vmem:[%s173 + $0x98] sm:$0xff]
                  %190 = vst [vmem:[%s174 + $0x38] sm:$0xff] %v189
                $region48: #{_efdm_loss_impl.5} parent=42 // loop_footer
                  %s172 = sadd.s32 1, %s168
                $region49: #{_efdm_loss_impl.5} parent=42 // loop_footer_branch
                  %167 = sbr.rel target = $region45
                $region50: #{_efdm_loss_impl.5} parent=42 // loop_exit
                  _
              $region43: #{_efdm_loss_impl.5} parent=27 // pred_fallthru
                _
              // Predicated region
              $region51: #{_efdm_loss_impl.5} parent=27 // pred_check
                _
              $region52: #{_efdm_loss_impl.5} parent=27 // pred_check_branch
                %192 = sbr.rel target = $region54
              $region53: #{_efdm_loss_impl.5} parent=27 // pred_region
                _
              $region54: #{_efdm_loss_impl.5} parent=27 // pred_fallthru
                _
            $region28: #{_efdm_loss_impl.5} parent=23 // pred_fallthru
              _
            // Predicated region
            $region29: #{_efdm_loss_impl.5} parent=23 // pred_check
              _
            $region30: #{_efdm_loss_impl.5} parent=23 // pred_check_branch
              %138 = sbr.rel target = $region32
            $region31: #{_efdm_loss_impl.5} parent=23 // pred_region
              %s140 = ssub.s32 256, 1
              loop: start=0, step=1, limit=1
              $region33: #{_efdm_loss_impl.5} parent=31 // loop_pre_header
                _
              $region34: #{_efdm_loss_impl.5} parent=31 // loop_header
                %s142 = sphi 0, %s146
                %p143 = scmp.ge.s32.totalorder %s142, 1
                %s147 = sphi %s132, %s132
                %s148 = sphi %s127, %s127
              $region35: #{_efdm_loss_impl.5} parent=31 // loop_header_branch
                %145 = sbr.rel (%p143) target = $region39
              $region36: #{_efdm_loss_impl.5} parent=31 // loop_body
                %v149 = vld [vmem:[%s147] sm:%s140]
                %150 = vst [vmem:[%s148] sm:%s140] %v149
                %v151 = vld [vmem:[%s147 + $0x8] sm:%s140]
                %152 = vst [vmem:[%s148 + $0x8] sm:%s140] %v151
                %v153 = vld [vmem:[%s147 + $0x10] sm:%s140]
                %154 = vst [vmem:[%s148 + $0x10] sm:%s140] %v153
                %v155 = vld [vmem:[%s147 + $0x18] sm:%s140]
                %156 = vst [vmem:[%s148 + $0x18] sm:%s140] %v155
                %v157 = vld [vmem:[%s147 + $0x80] sm:%s140]
                %158 = vst [vmem:[%s148 + $0x20] sm:%s140] %v157
                %v159 = vld [vmem:[%s147 + $0x88] sm:%s140]
                %160 = vst [vmem:[%s148 + $0x28] sm:%s140] %v159
                %v161 = vld [vmem:[%s147 + $0x90] sm:%s140]
                %162 = vst [vmem:[%s148 + $0x30] sm:%s140] %v161
                %v163 = vld [vmem:[%s147 + $0x98] sm:%s140]
                %164 = vst [vmem:[%s148 + $0x38] sm:%s140] %v163
              $region37: #{_efdm_loss_impl.5} parent=31 // loop_footer
                %s146 = sadd.s32 1, %s142
              $region38: #{_efdm_loss_impl.5} parent=31 // loop_footer_branch
                %141 = sbr.rel target = $region34
              $region39: #{_efdm_loss_impl.5} parent=31 // loop_exit
                _
            $region32: #{_efdm_loss_impl.5} parent=23 // pred_fallthru
              _
          $region24: #{_efdm_loss_impl.5} parent=19 // pred_fallthru
            _
          %193 = vnop
        $region20: #{_efdm_loss_impl.5} parent=15 // pred_fallthru
          _
        // Predicated region
        $region55: #{_efdm_loss_impl.5} parent=15 // pred_check
          %p194 = pneg %p70
        $region56: #{_efdm_loss_impl.5} parent=15 // pred_check_branch
          %196 = sbr.rel (%p194) target = $region58
        $region57: #{_efdm_loss_impl.5} parent=15 // pred_region
          %s197 = sand.u32 %s60, 1
          %s198 = sand.u32 %s60, 1
          %s199 = smul.addr %s198, 64
          %s200 = scalar_lea.vmem [#allocation4], %s199
          %s201 = smul.u32 4, %s16
          %s202 = smul.addr %s15, 32
          %s203 = sadd.s32 %s201, %s202
          %s204 = smul.addr %s203, 8
          %s205 = scalar_lea.vmem %s1, %s204
          // Predicated region
          $region59: #{_efdm_loss_impl.5} parent=57 // pred_check
            _
          $region60: #{_efdm_loss_impl.5} parent=57 // pred_check_branch
            %207 = sbr.rel (0) target = $region62
          $region61: #{_efdm_loss_impl.5} parent=57 // pred_region
            // Predicated region
            $region63: #{_efdm_loss_impl.5} parent=61 // pred_check
              _
            $region64: #{_efdm_loss_impl.5} parent=61 // pred_check_branch
              %209 = sbr.rel (0) target = $region66
            $region65: #{_efdm_loss_impl.5} parent=61 // pred_region
              // Predicated region
              $region78: #{_efdm_loss_impl.5} parent=65 // pred_check
                _
              $region79: #{_efdm_loss_impl.5} parent=65 // pred_check_branch
                %239 = sbr.rel (0) target = $region81
              $region80: #{_efdm_loss_impl.5} parent=65 // pred_region
                loop: start=0, step=1, limit=1
                $region82: #{_efdm_loss_impl.5} parent=80 // loop_pre_header
                  _
                $region83: #{_efdm_loss_impl.5} parent=80 // loop_header
                  %s241 = sphi 0, %s245
                  %p242 = scmp.ge.s32.totalorder %s241, 1
                  %s246 = sphi %s205, %s205
                  %s247 = sphi %s200, %s200
                $region84: #{_efdm_loss_impl.5} parent=80 // loop_header_branch
                  %244 = sbr.rel (%p242) target = $region88
                $region85: #{_efdm_loss_impl.5} parent=80 // loop_body
                  %v248 = vld [vmem:[%s246] sm:$0xff]
                  %249 = vst [vmem:[%s247] sm:$0xff] %v248
                  %v250 = vld [vmem:[%s246 + $0x8] sm:$0xff]
                  %251 = vst [vmem:[%s247 + $0x8] sm:$0xff] %v250
                  %v252 = vld [vmem:[%s246 + $0x10] sm:$0xff]
                  %253 = vst [vmem:[%s247 + $0x10] sm:$0xff] %v252
                  %v254 = vld [vmem:[%s246 + $0x18] sm:$0xff]
                  %255 = vst [vmem:[%s247 + $0x18] sm:$0xff] %v254
                  %v256 = vld [vmem:[%s246 + $0x80] sm:$0xff]
                  %257 = vst [vmem:[%s247 + $0x20] sm:$0xff] %v256
                  %v258 = vld [vmem:[%s246 + $0x88] sm:$0xff]
                  %259 = vst [vmem:[%s247 + $0x28] sm:$0xff] %v258
                  %v260 = vld [vmem:[%s246 + $0x90] sm:$0xff]
                  %261 = vst [vmem:[%s247 + $0x30] sm:$0xff] %v260
                  %v262 = vld [vmem:[%s246 + $0x98] sm:$0xff]
                  %263 = vst [vmem:[%s247 + $0x38] sm:$0xff] %v262
                $region86: #{_efdm_loss_impl.5} parent=80 // loop_footer
                  %s245 = sadd.s32 1, %s241
                $region87: #{_efdm_loss_impl.5} parent=80 // loop_footer_branch
                  %240 = sbr.rel target = $region83
                $region88: #{_efdm_loss_impl.5} parent=80 // loop_exit
                  _
              $region81: #{_efdm_loss_impl.5} parent=65 // pred_fallthru
                _
              // Predicated region
              $region89: #{_efdm_loss_impl.5} parent=65 // pred_check
                _
              $region90: #{_efdm_loss_impl.5} parent=65 // pred_check_branch
                %265 = sbr.rel target = $region92
              $region91: #{_efdm_loss_impl.5} parent=65 // pred_region
                _
              $region92: #{_efdm_loss_impl.5} parent=65 // pred_fallthru
                _
            $region66: #{_efdm_loss_impl.5} parent=61 // pred_fallthru
              _
            // Predicated region
            $region67: #{_efdm_loss_impl.5} parent=61 // pred_check
              _
            $region68: #{_efdm_loss_impl.5} parent=61 // pred_check_branch
              %211 = sbr.rel target = $region70
            $region69: #{_efdm_loss_impl.5} parent=61 // pred_region
              %s213 = ssub.s32 256, 1
              loop: start=0, step=1, limit=1
              $region71: #{_efdm_loss_impl.5} parent=69 // loop_pre_header
                _
              $region72: #{_efdm_loss_impl.5} parent=69 // loop_header
                %s215 = sphi 0, %s219
                %p216 = scmp.ge.s32.totalorder %s215, 1
                %s220 = sphi %s205, %s205
                %s221 = sphi %s200, %s200
              $region73: #{_efdm_loss_impl.5} parent=69 // loop_header_branch
                %218 = sbr.rel (%p216) target = $region77
              $region74: #{_efdm_loss_impl.5} parent=69 // loop_body
                %v222 = vld [vmem:[%s220] sm:%s213]
                %223 = vst [vmem:[%s221] sm:%s213] %v222
                %v224 = vld [vmem:[%s220 + $0x8] sm:%s213]
                %225 = vst [vmem:[%s221 + $0x8] sm:%s213] %v224
                %v226 = vld [vmem:[%s220 + $0x10] sm:%s213]
                %227 = vst [vmem:[%s221 + $0x10] sm:%s213] %v226
                %v228 = vld [vmem:[%s220 + $0x18] sm:%s213]
                %229 = vst [vmem:[%s221 + $0x18] sm:%s213] %v228
                %v230 = vld [vmem:[%s220 + $0x80] sm:%s213]
                %231 = vst [vmem:[%s221 + $0x20] sm:%s213] %v230
                %v232 = vld [vmem:[%s220 + $0x88] sm:%s213]
                %233 = vst [vmem:[%s221 + $0x28] sm:%s213] %v232
                %v234 = vld [vmem:[%s220 + $0x90] sm:%s213]
                %235 = vst [vmem:[%s221 + $0x30] sm:%s213] %v234
                %v236 = vld [vmem:[%s220 + $0x98] sm:%s213]
                %237 = vst [vmem:[%s221 + $0x38] sm:%s213] %v236
              $region75: #{_efdm_loss_impl.5} parent=69 // loop_footer
                %s219 = sadd.s32 1, %s215
              $region76: #{_efdm_loss_impl.5} parent=69 // loop_footer_branch
                %214 = sbr.rel target = $region72
              $region77: #{_efdm_loss_impl.5} parent=69 // loop_exit
                _
            $region70: #{_efdm_loss_impl.5} parent=61 // pred_fallthru
              _
          $region62: #{_efdm_loss_impl.5} parent=57 // pred_fallthru
            _
          %266 = vnop
        $region58: #{_efdm_loss_impl.5} parent=15 // pred_fallthru
          _
      $region16: #{_efdm_loss_impl.5} parent=5 // pred_fallthru
        _
      %p267 = scmp.le.s32.totalorder 1, %s8
      %p268 = scmp.lt.s32.totalorder %s8, 9
      %p269 = pnand %p267, %p268
      %p270 = pneg %p269
      // Predicated region
      $region93: #{_efdm_loss_impl.5} parent=5 // pred_check
        _
      $region94: #{_efdm_loss_impl.5} parent=5 // pred_check_branch
        %272 = sbr.rel (%p269) target = $region96
      $region95: #{_efdm_loss_impl.5} parent=5 // pred_region
        %s273 = ssub.s32 %s8, 1
        %s274 = sand.u32 %s35, 1
        %s275 = sand.u32 %s35, 1
        %s276 = smul.addr %s275, 64
        %s277 = scalar_lea.vmem [#allocation3], %s276
        // Predicated region
        $region97: #{_efdm_loss_impl.5} parent=95 // pred_check
          %p278 = pneg %p48
        $region98: #{_efdm_loss_impl.5} parent=95 // pred_check_branch
          %280 = sbr.rel (%p278) target = $region100
        $region99: #{_efdm_loss_impl.5} parent=95 // pred_region
          _
        $region100: #{_efdm_loss_impl.5} parent=95 // pred_fallthru
          _
        %s281 = sand.u32 %s63, 1
        %s282 = sand.u32 %s63, 1
        %s283 = smul.addr %s282, 64
        %s284 = scalar_lea.vmem [#allocation4], %s283
        // Predicated region
        $region101: #{_efdm_loss_impl.5} parent=95 // pred_check
          %p285 = pneg %p76
        $region102: #{_efdm_loss_impl.5} parent=95 // pred_check_branch
          %287 = sbr.rel (%p285) target = $region104
        $region103: #{_efdm_loss_impl.5} parent=95 // pred_region
          _
        $region104: #{_efdm_loss_impl.5} parent=95 // pred_fallthru
          _
        %s288 = sand.u32 %s35, 1
        %s289 = sand.u32 %s35, 1
        %s290 = smul.addr %s289, 64
        %s291 = scalar_lea.vmem [#allocation3], %s290
        %p292 = pneg %p48
        %p293 = pneg %p45
        %s294 = sand.u32 %s63, 1
        %s295 = sand.u32 %s63, 1
        %s296 = smul.addr %s295, 64
        %s297 = scalar_lea.vmem [#allocation4], %s296
        %p298 = pneg %p76
        %p299 = pneg %p73
        %p300 = pneg %p102
        %p301 = pneg %p99
        %p302 = scmp.lt.s32.totalorder %s17, 1
        %s303 = scalar_select %p302, %s17, 1
        %s304 = smul.addr %s303, 2
        %s305 = scalar_lea.vmem %s2, %s304
        %s306 = smul.u32 4, %s18
        %s307 = smul.u32 4, %s18
        %p308 = scmp.lt.s32.totalorder %s17, 1
        %s309 = scalar_select %p308, %s17, 1
        %s310 = smul.addr %s309, 2
        %s311 = scalar_lea.vmem %s2, %s310
        %p312 = scmp.eq.s32.totalorder %s18, 0
        // Predicated region
        $region105: #{_efdm_loss_impl.5} parent=95 // pred_check
          %p313 = pneg %p312
        $region106: #{_efdm_loss_impl.5} parent=95 // pred_check_branch
          %315 = sbr.rel (%p313) target = $region108
        $region107: #{_efdm_loss_impl.5} parent=95 // pred_region
          %316 = vst [vmem:[#allocation2] sm:$0xff] 0.0
          %317 = vst [vmem:[#allocation2 + $0x8] sm:$0xff] 0.0
          %318 = vst [vmem:[#allocation2 + $0x10] sm:$0xff] 0.0
          %319 = vst [vmem:[#allocation2 + $0x18] sm:$0xff] 0.0
        $region108: #{_efdm_loss_impl.5} parent=95 // pred_fallthru
          _
        %v320 = vld [vmem:[%s277] sm:$0xff]
        %v321 = vld [vmem:[%s277 + $0x8] sm:$0xff]
        %v322 = vld [vmem:[%s277 + $0x10] sm:$0xff]
        %v323 = vld [vmem:[%s277 + $0x18] sm:$0xff]
        %v324 = vld [vmem:[%s284] sm:$0xff]
        %v325 = vld [vmem:[%s284 + $0x8] sm:$0xff]
        %v326 = vld [vmem:[%s284 + $0x10] sm:$0xff]
        %v327 = vld [vmem:[%s284 + $0x18] sm:$0xff]
        %v328 = vsub.f32 %v320, %v324
        %v329 = vsub.f32 %v321, %v325
        %v330 = vsub.f32 %v322, %v326
        %v331 = vsub.f32 %v323, %v327
        %v332 = vmul.f32 %v328, %v328
        %v333 = vmul.f32 %v329, %v329
        %v334 = vmul.f32 %v330, %v330
        %v335 = vmul.f32 %v331, %v331
        %v336 = vadd.f32 %v332, %v333
        %v337 = vadd.f32 %v336, %v334
        %v338 = vadd.f32 %v337, %v335
        %s339 = scalar_lea.vmem %s284, 32 [#allocation4]
        %v340 = vld [vmem:[%s339] sm:$0xff]
        %v341 = vld [vmem:[%s339 + $0x8] sm:$0xff]
        %v342 = vld [vmem:[%s339 + $0x10] sm:$0xff]
        %v343 = vld [vmem:[%s339 + $0x18] sm:$0xff]
        %v344 = vsub.f32 %v320, %v340
        %v345 = vsub.f32 %v321, %v341
        %v346 = vsub.f32 %v322, %v342
        %v347 = vsub.f32 %v323, %v343
        %v348 = vmul.f32 %v344, %v344
        %v349 = vmul.f32 %v345, %v345
        %v350 = vmul.f32 %v346, %v346
        %v351 = vmul.f32 %v347, %v347
        %v352 = vadd.f32 %v348, %v349
        %v353 = vadd.f32 %v352, %v350
        %v354 = vadd.f32 %v353, %v351
        %s355 = scalar_lea.vmem %s277, 32 [#allocation3]
        %v356 = vld [vmem:[%s355] sm:$0xff]
        %v357 = vld [vmem:[%s355 + $0x8] sm:$0xff]
        %v358 = vld [vmem:[%s355 + $0x10] sm:$0xff]
        %v359 = vld [vmem:[%s355 + $0x18] sm:$0xff]
        %v360 = vsub.f32 %v356, %v324
        %v361 = vsub.f32 %v357, %v325
        %v362 = vsub.f32 %v358, %v326
        %v363 = vsub.f32 %v359, %v327
        %v364 = vmul.f32 %v360, %v360
        %v365 = vmul.f32 %v361, %v361
        %v366 = vmul.f32 %v362, %v362
        %v367 = vmul.f32 %v363, %v363
        %v368 = vadd.f32 %v364, %v365
        %v369 = vadd.f32 %v368, %v366
        %v370 = vadd.f32 %v369, %v367
        %v371 = vsub.f32 %v356, %v340
        %v372 = vsub.f32 %v357, %v341
        %v373 = vsub.f32 %v358, %v342
        %v374 = vsub.f32 %v359, %v343
        %v375 = vmul.f32 %v371, %v371
        %v376 = vmul.f32 %v372, %v372
        %v377 = vmul.f32 %v373, %v373
        %v378 = vmul.f32 %v374, %v374
        %v379 = vadd.f32 %v375, %v376
        %v380 = vadd.f32 %v379, %v377
        %v381 = vadd.f32 %v380, %v378
        %v382 = vld [vmem:[#allocation2] sm:$0xff]
        %v383 = vld [vmem:[#allocation2 + $0x8] sm:$0xff]
        %v384 = vld [vmem:[#allocation2 + $0x10] sm:$0xff]
        %v385 = vld [vmem:[#allocation2 + $0x18] sm:$0xff]
        %v386 = vadd.f32 %v382, %v338
        %v387 = vadd.f32 %v383, %v354
        %v388 = vadd.f32 %v384, %v370
        %v389 = vadd.f32 %v385, %v381
        %390 = vst [vmem:[#allocation2] sm:$0xff] %v386
        %391 = vst [vmem:[#allocation2 + $0x8] sm:$0xff] %v387
        %392 = vst [vmem:[#allocation2 + $0x10] sm:$0xff] %v388
        %393 = vst [vmem:[#allocation2 + $0x18] sm:$0xff] %v389
        %p394 = scmp.eq.s32.totalorder %s18, 3
        // Predicated region
        $region109: #{_efdm_loss_impl.5} parent=95 // pred_check
          %p395 = pneg %p394
        $region110: #{_efdm_loss_impl.5} parent=95 // pred_check_branch
          %397 = sbr.rel (%p395) target = $region112
        $region111: #{_efdm_loss_impl.5} parent=95 // pred_region
          %v398 = vld [vmem:[#allocation2] sm:$0xff]
          %v399 = vld [vmem:[#allocation2 + $0x8] sm:$0xff]
          %v400 = vld [vmem:[#allocation2 + $0x10] sm:$0xff]
          %v401 = vld [vmem:[#allocation2 + $0x18] sm:$0xff]
          %v402 = vrot.slane %v398, 4
          %v403 = vadd.f32 %v398, %v402
          %v404 = vrot.slane %v403, 2
          %v405 = vadd.f32 %v403, %v404
          %v406 = vrot.slane %v405, 1
          %v407 = vadd.f32 %v405, %v406
          %v408 = vrot.slane %v399, 4
          %v409 = vadd.f32 %v399, %v408
          %v410 = vrot.slane %v409, 2
          %v411 = vadd.f32 %v409, %v410
          %v412 = vrot.slane %v411, 1
          %v413 = vadd.f32 %v411, %v412
          %v414 = vrot.slane %v400, 4
          %v415 = vadd.f32 %v400, %v414
          %v416 = vrot.slane %v415, 2
          %v417 = vadd.f32 %v415, %v416
          %v418 = vrot.slane %v417, 1
          %v419 = vadd.f32 %v417, %v418
          %v420 = vrot.slane %v401, 4
          %v421 = vadd.f32 %v401, %v420
          %v422 = vrot.slane %v421, 2
          %v423 = vadd.f32 %v421, %v422
          %v424 = vrot.slane %v423, 1
          %v425 = vadd.f32 %v423, %v424
          %vm430 = vcmask 1041409
          %v431 = vsel %vm430, %v413, %v407
          %v432 = vsel %vm430, %v425, %v419
          %vm435 = vcmask 1041408
          %v436 = vsel %vm435, %v431, 0.0
          %437 = vadd.xlane.f32.xlu0 %v436
          %v438 = vpop.xlane.xlu0 %437
          %v439 = vsel %vm435, %v432, 0.0
          %440 = vadd.xlane.f32.xlu0 %v439
          %v441 = vpop.xlane.xlu0 %440
          %v444 = vlaneseq
          %v445 = vand.u32 %v444, 127
          %v446 = vperm.slane %v438, %v445
          %v447 = vperm.slane %v441, %v445
          %v448 = vsel %vm430, %v447, %v446
          %vm450 = vcmask 9216
          %451 = vst.msk [vmem:[%s311] sm:$0x3] %vm450, %v448
        $region112: #{_efdm_loss_impl.5} parent=95 // pred_fallthru
          _
        %p452 = scmp.lt.s32.totalorder %s17, 1
        %s453 = scalar_select %p452, %s17, 1
        %s454 = smul.addr %s453, 2
        %s455 = scalar_lea.vmem %s2, %s454
        // Predicated region
        $region113: #{_efdm_loss_impl.5} parent=95 // pred_check
          %p456 = pneg %p99
        $region114: #{_efdm_loss_impl.5} parent=95 // pred_check_branch
          %458 = sbr.rel (%p456) target = $region116
        $region115: #{_efdm_loss_impl.5} parent=95 // pred_region
          _
        $region116: #{_efdm_loss_impl.5} parent=95 // pred_fallthru
          _
      $region96: #{_efdm_loss_impl.5} parent=5 // pred_fallthru
        _
      %p459 = scmp.le.s32.totalorder 2, %s8
      // Predicated region
      $region117: #{_efdm_loss_impl.5} parent=5 // pred_check
        %p460 = pneg %p459
      $region118: #{_efdm_loss_impl.5} parent=5 // pred_check_branch
        %462 = sbr.rel (%p460) target = $region120
      $region119: #{_efdm_loss_impl.5} parent=5 // pred_region
        %s463 = ssub.s32 %s8, 2
        // Predicated region
        $region121: #{_efdm_loss_impl.5} parent=119 // pred_check
          %p464 = pneg %p105
        $region122: #{_efdm_loss_impl.5} parent=119 // pred_check_branch
          %466 = sbr.rel (%p464) target = $region124
        $region123: #{_efdm_loss_impl.5} parent=119 // pred_region
          %p467 = scmp.lt.s32.totalorder %s19, 1
          %s468 = scalar_select %p467, %s19, 1
          %s469 = smul.addr %s468, 2
          %s470 = scalar_lea.vmem %s2, %s469
        $region124: #{_efdm_loss_impl.5} parent=119 // pred_fallthru
          _
      $region120: #{_efdm_loss_impl.5} parent=5 // pred_fallthru
        _
    $region6: #{_efdm_loss_impl.5} parent=1 // loop_footer
      %s12 = sadd.s32 1, %s8
    $region7: #{_efdm_loss_impl.5} parent=1 // loop_footer_branch
      %7 = sbr.rel target = $region3
    $region8: #{_efdm_loss_impl.5} parent=1 // loop_exit
      _

// kernel: _efdm_loss_impl.7
$region0: #{_efdm_loss_impl.7}
  #allocation0 [shape = 'u32[]', space=smem, size = 0x4, offset = 0x4, fixed_abs, tag = 'smem constant byte address 0x4 - core index']
  #allocation1 [shape = 'u32[72,128]{1,0:T(1,128)}', space=vmem, size = 0x9000, scoped, tag = 'internal scratch']
  #allocation2 [shape = 'f32[2,2,8,128]{3,2,1,0:T(8,128)}', space=vmem, size = 0x4000, scoped, tag = 'scratch operand']
  %s0 = inlined_call_operand.vmem [shape: f32[2,2,64,128], index: 0, kind: input, shape index: {}]
  %s1 = inlined_call_operand.vmem [shape: f32[2,2,64,128], index: 1, kind: input, shape index: {}]
  %s2 = inlined_call_operand.vmem [shape: f32[2,2,2], index: 2, kind: output, shape index: {}]
  %s3 = sld [smem:[#allocation0]]
  $region125: #{_efdm_loss_impl.7} parent=0
    _
  %s5 = ssub.s32 1, %s3
  %s6 = scalar_select 0, %s5, %s3
  $region1: #{_efdm_loss_impl.7} parent=0
    #allocation3 [shape = 'u8[65536]{0}', space=vmem, size = 0x10000, scoped, tag = 'input window, operand 0']
    #allocation4 [shape = 'u8[65536]{0}', space=vmem, size = 0x10000, scoped, tag = 'input window, operand 1']
    loop: start=0, step=1, limit=6
    $region2: #{_efdm_loss_impl.7} parent=1 // loop_pre_header
      _
    $region3: #{_efdm_loss_impl.7} parent=1 // loop_header
      %s8 = sphi 0, %s12
      %p9 = scmp.ge.s32.totalorder %s8, 6
      %s15 = sphi 0, %s27
      %s16 = sphi 0, %s23
      %s17 = sphi 0, %s15
      %s18 = sphi 0, %s16
      %s19 = sphi 0, %s17
      %s20 = sphi 0, %s18
      %s32 = sphi 0, %s34
      %s35 = sphi 0, %s32
      %s36 = sphi 0, %s35
      %s52 = sphi 0, %s36
      %s60 = sphi 0, %s62
      %s63 = sphi 0, %s60
      %s64 = sphi 0, %s63
      %s80 = sphi 0, %s64
      %s86 = sphi 0, %s88
      %s89 = sphi 0, %s86
      %s90 = sphi 0, %s89
      %s106 = sphi 0, %s90
    $region4: #{_efdm_loss_impl.7} parent=1 // loop_header_branch
      %11 = sbr.rel (%p9) target = $region8
    $region5: #{_efdm_loss_impl.7} parent=1 // loop_body
      %s13 = ssub.s32 %s8, 1
      %s14 = ssub.s32 %s8, 2
      %s21 = sadd.s32 1, %s16
      %p22 = scmp.ge.s32.totalorder %s21, 2
      %s23 = scalar_select %p22, 0, %s21
      %s24 = sadd.s32 1, %s15
      %s25 = scalar_select %p22, %s24, %s15
      %p26 = scmp.ge.s32.totalorder %s25, 2
      %s27 = scalar_select %p26, 0, %s25
      %s28 = ssub.s32 %s15, %s27
      %s29 = ssub.s32 %s16, %s23
      %s30 = sor.u32 %s28, %s29
      %p31 = scmp.eq.s32.totalorder %s30, 0
      %s33 = sadd.s32 %s32, 1
      %s34 = scalar_select %p31, %s32, %s33
      %p37 = pneg %p31
      %p38 = scmp.eq.s32.totalorder %s8, 3
      %p39 = por %p37, %p38
      %p40 = scmp.ne.s32.totalorder %s32, %s35
      %p41 = scmp.eq.s32.totalorder %s8, 0
      %p42 = por %p40, %p41
      %p43 = scmp.ne.s32.totalorder %s32, %s35
      %p44 = scmp.eq.s32.totalorder %s13, 3
      %p45 = por %p43, %p44
      %p46 = scmp.ne.s32.totalorder %s35, %s36
      %p47 = scmp.eq.s32.totalorder %s13, 0
      %p48 = por %p46, %p47
      %p49 = scmp.ne.s32.totalorder %s35, %s36
      %p50 = scmp.eq.s32.totalorder %s14, 3
      %p51 = por %p49, %p50
      %p53 = scmp.ne.s32.totalorder %s36, %s52
      %p54 = scmp.eq.s32.totalorder %s14, 0
      %p55 = por %p53, %p54
      %s56 = ssub.s32 %s15, %s27
      %s57 = ssub.s32 %s16, %s23
      %s58 = sor.u32 %s56, %s57
      %p59 = scmp.eq.s32.totalorder %s58, 0
      %s61 = sadd.s32 %s60, 1
      %s62 = scalar_select %p59, %s60, %s61
      %p65 = pneg %p59
      %p66 = scmp.eq.s32.totalorder %s8, 3
      %p67 = por %p65, %p66
      %p68 = scmp.ne.s32.totalorder %s60, %s63
      %p69 = scmp.eq.s32.totalorder %s8, 0
      %p70 = por %p68, %p69
      %p71 = scmp.ne.s32.totalorder %s60, %s63
      %p72 = scmp.eq.s32.totalorder %s13, 3
      %p73 = por %p71, %p72
      %p74 = scmp.ne.s32.totalorder %s63, %s64
      %p75 = scmp.eq.s32.totalorder %s13, 0
      %p76 = por %p74, %p75
      %p77 = scmp.ne.s32.totalorder %s63, %s64
      %p78 = scmp.eq.s32.totalorder %s14, 3
      %p79 = por %p77, %p78
      %p81 = scmp.ne.s32.totalorder %s64, %s80
      %p82 = scmp.eq.s32.totalorder %s14, 0
      %p83 = por %p81, %p82
      %s84 = ssub.s32 %s15, %s27
      %p85 = scmp.eq.s32.totalorder %s84, 0
      %s87 = sadd.s32 %s86, 1
      %s88 = scalar_select %p85, %s86, %s87
      %p91 = pneg %p85
      %p92 = scmp.eq.s32.totalorder %s8, 3
      %p93 = por %p91, %p92
      %p94 = scmp.ne.s32.totalorder %s86, %s89
      %p95 = scmp.eq.s32.totalorder %s8, 0
      %p96 = por %p94, %p95
      %p97 = scmp.ne.s32.totalorder %s86, %s89
      %p98 = scmp.eq.s32.totalorder %s13, 3
      %p99 = por %p97, %p98
      %p100 = scmp.ne.s32.totalorder %s89, %s90
      %p101 = scmp.eq.s32.totalorder %s13, 0
      %p102 = por %p100, %p101
      %p103 = scmp.ne.s32.totalorder %s89, %s90
      %p104 = scmp.eq.s32.totalorder %s14, 3
      %p105 = por %p103, %p104
      %p107 = scmp.ne.s32.totalorder %s90, %s106
      %p108 = scmp.eq.s32.totalorder %s14, 0
      %p109 = por %p107, %p108
      %p110 = scmp.le.s32.totalorder 1, %s8
      %p111 = scmp.lt.s32.totalorder %s8, 5
      %p112 = pnand %p110, %p111
      %p113 = pneg %p112
      // Predicated region
      $region9: #{_efdm_loss_impl.7} parent=5 // pred_check
        _
      $region10: #{_efdm_loss_impl.7} parent=5 // pred_check_branch
        %115 = sbr.rel (%p112) target = $region12
      $region11: #{_efdm_loss_impl.7} parent=5 // pred_region
        %s116 = ssub.s32 %s8, 1
      $region12: #{_efdm_loss_impl.7} parent=5 // pred_fallthru
        _
      %p117 = scmp.lt.s32.totalorder %s8, 4
      // Predicated region
      $region13: #{_efdm_loss_impl.7} parent=5 // pred_check
        %p118 = pneg %p117
      $region14: #{_efdm_loss_impl.7} parent=5 // pred_check_branch
        %120 = sbr.rel (%p118) target = $region16
      $region15: #{_efdm_loss_impl.7} parent=5 // pred_region
        // Predicated region
        $region17: #{_efdm_loss_impl.7} parent=15 // pred_check
          %p121 = pneg %p42
        $region18: #{_efdm_loss_impl.7} parent=15 // pred_check_branch
          %123 = sbr.rel (%p121) target = $region20
        $region19: #{_efdm_loss_impl.7} parent=15 // pred_region
          %s124 = sand.u32 %s32, 1
          %s125 = sand.u32 %s32, 1
          %s126 = smul.addr %s125, 64
          %s127 = scalar_lea.vmem [#allocation3], %s126
          %s128 = smul.u32 4, %s16
          %s129 = smul.addr %s15, 16
          %s130 = sadd.s32 %s128, %s129
          %s131 = smul.addr %s130, 8
          %s132 = scalar_lea.vmem %s0, %s131
          // Predicated region
          $region21: #{_efdm_loss_impl.7} parent=19 // pred_check
            _
          $region22: #{_efdm_loss_impl.7} parent=19 // pred_check_branch
            %134 = sbr.rel (0) target = $region24
          $region23: #{_efdm_loss_impl.7} parent=19 // pred_region
            // Predicated region
            $region25: #{_efdm_loss_impl.7} parent=23 // pred_check
              _
            $region26: #{_efdm_loss_impl.7} parent=23 // pred_check_branch
              %136 = sbr.rel (0) target = $region28
            $region27: #{_efdm_loss_impl.7} parent=23 // pred_region
              // Predicated region
              $region40: #{_efdm_loss_impl.7} parent=27 // pred_check
                _
              $region41: #{_efdm_loss_impl.7} parent=27 // pred_check_branch
                %166 = sbr.rel (0) target = $region43
              $region42: #{_efdm_loss_impl.7} parent=27 // pred_region
                loop: start=0, step=1, limit=1
                $region44: #{_efdm_loss_impl.7} parent=42 // loop_pre_header
                  _
                $region45: #{_efdm_loss_impl.7} parent=42 // loop_header
                  %s168 = sphi 0, %s172
                  %p169 = scmp.ge.s32.totalorder %s168, 1
                  %s173 = sphi %s132, %s132
                  %s174 = sphi %s127, %s127
                $region46: #{_efdm_loss_impl.7} parent=42 // loop_header_branch
                  %171 = sbr.rel (%p169) target = $region50
                $region47: #{_efdm_loss_impl.7} parent=42 // loop_body
                  %v175 = vld [vmem:[%s173] sm:$0xff]
                  %176 = vst [vmem:[%s174] sm:$0xff] %v175
                  %v177 = vld [vmem:[%s173 + $0x8] sm:$0xff]
                  %178 = vst [vmem:[%s174 + $0x8] sm:$0xff] %v177
                  %v179 = vld [vmem:[%s173 + $0x10] sm:$0xff]
                  %180 = vst [vmem:[%s174 + $0x10] sm:$0xff] %v179
                  %v181 = vld [vmem:[%s173 + $0x18] sm:$0xff]
                  %182 = vst [vmem:[%s174 + $0x18] sm:$0xff] %v181
                  %v183 = vld [vmem:[%s173 + $0x40] sm:$0xff]
                  %184 = vst [vmem:[%s174 + $0x20] sm:$0xff] %v183
                  %v185 = vld [vmem:[%s173 + $0x48] sm:$0xff]
                  %186 = vst [vmem:[%s174 + $0x28] sm:$0xff] %v185
                  %v187 = vld [vmem:[%s173 + $0x50] sm:$0xff]
                  %188 = vst [vmem:[%s174 + $0x30] sm:$0xff] %v187
                  %v189 = vld [vmem:[%s173 + $0x58] sm:$0xff]
                  %190 = vst [vmem:[%s174 + $0x38] sm:$0xff] %v189
                $region48: #{_efdm_loss_impl.7} parent=42 // loop_footer
                  %s172 = sadd.s32 1, %s168
                $region49: #{_efdm_loss_impl.7} parent=42 // loop_footer_branch
                  %167 = sbr.rel target = $region45
                $region50: #{_efdm_loss_impl.7} parent=42 // loop_exit
                  _
              $region43: #{_efdm_loss_impl.7} parent=27 // pred_fallthru
                _
              // Predicated region
              $region51: #{_efdm_loss_impl.7} parent=27 // pred_check
                _
              $region52: #{_efdm_loss_impl.7} parent=27 // pred_check_branch
                %192 = sbr.rel target = $region54
              $region53: #{_efdm_loss_impl.7} parent=27 // pred_region
                _
              $region54: #{_efdm_loss_impl.7} parent=27 // pred_fallthru
                _
            $region28: #{_efdm_loss_impl.7} parent=23 // pred_fallthru
              _
            // Predicated region
            $region29: #{_efdm_loss_impl.7} parent=23 // pred_check
              _
            $region30: #{_efdm_loss_impl.7} parent=23 // pred_check_branch
              %138 = sbr.rel target = $region32
            $region31: #{_efdm_loss_impl.7} parent=23 // pred_region
              %s140 = ssub.s32 256, 1
              loop: start=0, step=1, limit=1
              $region33: #{_efdm_loss_impl.7} parent=31 // loop_pre_header
                _
              $region34: #{_efdm_loss_impl.7} parent=31 // loop_header
                %s142 = sphi 0, %s146
                %p143 = scmp.ge.s32.totalorder %s142, 1
                %s147 = sphi %s132, %s132
                %s148 = sphi %s127, %s127
              $region35: #{_efdm_loss_impl.7} parent=31 // loop_header_branch
                %145 = sbr.rel (%p143) target = $region39
              $region36: #{_efdm_loss_impl.7} parent=31 // loop_body
                %v149 = vld [vmem:[%s147] sm:%s140]
                %150 = vst [vmem:[%s148] sm:%s140] %v149
                %v151 = vld [vmem:[%s147 + $0x8] sm:%s140]
                %152 = vst [vmem:[%s148 + $0x8] sm:%s140] %v151
                %v153 = vld [vmem:[%s147 + $0x10] sm:%s140]
                %154 = vst [vmem:[%s148 + $0x10] sm:%s140] %v153
                %v155 = vld [vmem:[%s147 + $0x18] sm:%s140]
                %156 = vst [vmem:[%s148 + $0x18] sm:%s140] %v155
                %v157 = vld [vmem:[%s147 + $0x40] sm:%s140]
                %158 = vst [vmem:[%s148 + $0x20] sm:%s140] %v157
                %v159 = vld [vmem:[%s147 + $0x48] sm:%s140]
                %160 = vst [vmem:[%s148 + $0x28] sm:%s140] %v159
                %v161 = vld [vmem:[%s147 + $0x50] sm:%s140]
                %162 = vst [vmem:[%s148 + $0x30] sm:%s140] %v161
                %v163 = vld [vmem:[%s147 + $0x58] sm:%s140]
                %164 = vst [vmem:[%s148 + $0x38] sm:%s140] %v163
              $region37: #{_efdm_loss_impl.7} parent=31 // loop_footer
                %s146 = sadd.s32 1, %s142
              $region38: #{_efdm_loss_impl.7} parent=31 // loop_footer_branch
                %141 = sbr.rel target = $region34
              $region39: #{_efdm_loss_impl.7} parent=31 // loop_exit
                _
            $region32: #{_efdm_loss_impl.7} parent=23 // pred_fallthru
              _
          $region24: #{_efdm_loss_impl.7} parent=19 // pred_fallthru
            _
          %193 = vnop
        $region20: #{_efdm_loss_impl.7} parent=15 // pred_fallthru
          _
        // Predicated region
        $region55: #{_efdm_loss_impl.7} parent=15 // pred_check
          %p194 = pneg %p70
        $region56: #{_efdm_loss_impl.7} parent=15 // pred_check_branch
          %196 = sbr.rel (%p194) target = $region58
        $region57: #{_efdm_loss_impl.7} parent=15 // pred_region
          %s197 = sand.u32 %s60, 1
          %s198 = sand.u32 %s60, 1
          %s199 = smul.addr %s198, 64
          %s200 = scalar_lea.vmem [#allocation4], %s199
          %s201 = smul.u32 4, %s16
          %s202 = smul.addr %s15, 16
          %s203 = sadd.s32 %s201, %s202
          %s204 = smul.addr %s203, 8
          %s205 = scalar_lea.vmem %s1, %s204
          // Predicated region
          $region59: #{_efdm_loss_impl.7} parent=57 // pred_check
            _
          $region60: #{_efdm_loss_impl.7} parent=57 // pred_check_branch
            %207 = sbr.rel (0) target = $region62
          $region61: #{_efdm_loss_impl.7} parent=57 // pred_region
            // Predicated region
            $region63: #{_efdm_loss_impl.7} parent=61 // pred_check
              _
            $region64: #{_efdm_loss_impl.7} parent=61 // pred_check_branch
              %209 = sbr.rel (0) target = $region66
            $region65: #{_efdm_loss_impl.7} parent=61 // pred_region
              // Predicated region
              $region78: #{_efdm_loss_impl.7} parent=65 // pred_check
                _
              $region79: #{_efdm_loss_impl.7} parent=65 // pred_check_branch
                %239 = sbr.rel (0) target = $region81
              $region80: #{_efdm_loss_impl.7} parent=65 // pred_region
                loop: start=0, step=1, limit=1
                $region82: #{_efdm_loss_impl.7} parent=80 // loop_pre_header
                  _
                $region83: #{_efdm_loss_impl.7} parent=80 // loop_header
                  %s241 = sphi 0, %s245
                  %p242 = scmp.ge.s32.totalorder %s241, 1
                  %s246 = sphi %s205, %s205
                  %s247 = sphi %s200, %s200
                $region84: #{_efdm_loss_impl.7} parent=80 // loop_header_branch
                  %244 = sbr.rel (%p242) target = $region88
                $region85: #{_efdm_loss_impl.7} parent=80 // loop_body
                  %v248 = vld [vmem:[%s246] sm:$0xff]
                  %249 = vst [vmem:[%s247] sm:$0xff] %v248
                  %v250 = vld [vmem:[%s246 + $0x8] sm:$0xff]
                  %251 = vst [vmem:[%s247 + $0x8] sm:$0xff] %v250
                  %v252 = vld [vmem:[%s246 + $0x10] sm:$0xff]
                  %253 = vst [vmem:[%s247 + $0x10] sm:$0xff] %v252
                  %v254 = vld [vmem:[%s246 + $0x18] sm:$0xff]
                  %255 = vst [vmem:[%s247 + $0x18] sm:$0xff] %v254
                  %v256 = vld [vmem:[%s246 + $0x40] sm:$0xff]
                  %257 = vst [vmem:[%s247 + $0x20] sm:$0xff] %v256
                  %v258 = vld [vmem:[%s246 + $0x48] sm:$0xff]
                  %259 = vst [vmem:[%s247 + $0x28] sm:$0xff] %v258
                  %v260 = vld [vmem:[%s246 + $0x50] sm:$0xff]
                  %261 = vst [vmem:[%s247 + $0x30] sm:$0xff] %v260
                  %v262 = vld [vmem:[%s246 + $0x58] sm:$0xff]
                  %263 = vst [vmem:[%s247 + $0x38] sm:$0xff] %v262
                $region86: #{_efdm_loss_impl.7} parent=80 // loop_footer
                  %s245 = sadd.s32 1, %s241
                $region87: #{_efdm_loss_impl.7} parent=80 // loop_footer_branch
                  %240 = sbr.rel target = $region83
                $region88: #{_efdm_loss_impl.7} parent=80 // loop_exit
                  _
              $region81: #{_efdm_loss_impl.7} parent=65 // pred_fallthru
                _
              // Predicated region
              $region89: #{_efdm_loss_impl.7} parent=65 // pred_check
                _
              $region90: #{_efdm_loss_impl.7} parent=65 // pred_check_branch
                %265 = sbr.rel target = $region92
              $region91: #{_efdm_loss_impl.7} parent=65 // pred_region
                _
              $region92: #{_efdm_loss_impl.7} parent=65 // pred_fallthru
                _
            $region66: #{_efdm_loss_impl.7} parent=61 // pred_fallthru
              _
            // Predicated region
            $region67: #{_efdm_loss_impl.7} parent=61 // pred_check
              _
            $region68: #{_efdm_loss_impl.7} parent=61 // pred_check_branch
              %211 = sbr.rel target = $region70
            $region69: #{_efdm_loss_impl.7} parent=61 // pred_region
              %s213 = ssub.s32 256, 1
              loop: start=0, step=1, limit=1
              $region71: #{_efdm_loss_impl.7} parent=69 // loop_pre_header
                _
              $region72: #{_efdm_loss_impl.7} parent=69 // loop_header
                %s215 = sphi 0, %s219
                %p216 = scmp.ge.s32.totalorder %s215, 1
                %s220 = sphi %s205, %s205
                %s221 = sphi %s200, %s200
              $region73: #{_efdm_loss_impl.7} parent=69 // loop_header_branch
                %218 = sbr.rel (%p216) target = $region77
              $region74: #{_efdm_loss_impl.7} parent=69 // loop_body
                %v222 = vld [vmem:[%s220] sm:%s213]
                %223 = vst [vmem:[%s221] sm:%s213] %v222
                %v224 = vld [vmem:[%s220 + $0x8] sm:%s213]
                %225 = vst [vmem:[%s221 + $0x8] sm:%s213] %v224
                %v226 = vld [vmem:[%s220 + $0x10] sm:%s213]
                %227 = vst [vmem:[%s221 + $0x10] sm:%s213] %v226
                %v228 = vld [vmem:[%s220 + $0x18] sm:%s213]
                %229 = vst [vmem:[%s221 + $0x18] sm:%s213] %v228
                %v230 = vld [vmem:[%s220 + $0x40] sm:%s213]
                %231 = vst [vmem:[%s221 + $0x20] sm:%s213] %v230
                %v232 = vld [vmem:[%s220 + $0x48] sm:%s213]
                %233 = vst [vmem:[%s221 + $0x28] sm:%s213] %v232
                %v234 = vld [vmem:[%s220 + $0x50] sm:%s213]
                %235 = vst [vmem:[%s221 + $0x30] sm:%s213] %v234
                %v236 = vld [vmem:[%s220 + $0x58] sm:%s213]
                %237 = vst [vmem:[%s221 + $0x38] sm:%s213] %v236
              $region75: #{_efdm_loss_impl.7} parent=69 // loop_footer
                %s219 = sadd.s32 1, %s215
              $region76: #{_efdm_loss_impl.7} parent=69 // loop_footer_branch
                %214 = sbr.rel target = $region72
              $region77: #{_efdm_loss_impl.7} parent=69 // loop_exit
                _
            $region70: #{_efdm_loss_impl.7} parent=61 // pred_fallthru
              _
          $region62: #{_efdm_loss_impl.7} parent=57 // pred_fallthru
            _
          %266 = vnop
        $region58: #{_efdm_loss_impl.7} parent=15 // pred_fallthru
          _
      $region16: #{_efdm_loss_impl.7} parent=5 // pred_fallthru
        _
      %p267 = scmp.le.s32.totalorder 1, %s8
      %p268 = scmp.lt.s32.totalorder %s8, 5
      %p269 = pnand %p267, %p268
      %p270 = pneg %p269
      // Predicated region
      $region93: #{_efdm_loss_impl.7} parent=5 // pred_check
        _
      $region94: #{_efdm_loss_impl.7} parent=5 // pred_check_branch
        %272 = sbr.rel (%p269) target = $region96
      $region95: #{_efdm_loss_impl.7} parent=5 // pred_region
        %s273 = ssub.s32 %s8, 1
        %s274 = sand.u32 %s35, 1
        %s275 = sand.u32 %s35, 1
        %s276 = smul.addr %s275, 64
        %s277 = scalar_lea.vmem [#allocation3], %s276
        // Predicated region
        $region97: #{_efdm_loss_impl.7} parent=95 // pred_check
          %p278 = pneg %p48
        $region98: #{_efdm_loss_impl.7} parent=95 // pred_check_branch
          %280 = sbr.rel (%p278) target = $region100
        $region99: #{_efdm_loss_impl.7} parent=95 // pred_region
          _
        $region100: #{_efdm_loss_impl.7} parent=95 // pred_fallthru
          _
        %s281 = sand.u32 %s63, 1
        %s282 = sand.u32 %s63, 1
        %s283 = smul.addr %s282, 64
        %s284 = scalar_lea.vmem [#allocation4], %s283
        // Predicated region
        $region101: #{_efdm_loss_impl.7} parent=95 // pred_check
          %p285 = pneg %p76
        $region102: #{_efdm_loss_impl.7} parent=95 // pred_check_branch
          %287 = sbr.rel (%p285) target = $region104
        $region103: #{_efdm_loss_impl.7} parent=95 // pred_region
          _
        $region104: #{_efdm_loss_impl.7} parent=95 // pred_fallthru
          _
        %s288 = sand.u32 %s35, 1
        %s289 = sand.u32 %s35, 1
        %s290 = smul.addr %s289, 64
        %s291 = scalar_lea.vmem [#allocation3], %s290
        %p292 = pneg %p48
        %p293 = pneg %p45
        %s294 = sand.u32 %s63, 1
        %s295 = sand.u32 %s63, 1
        %s296 = smul.addr %s295, 64
        %s297 = scalar_lea.vmem [#allocation4], %s296
        %p298 = pneg %p76
        %p299 = pneg %p73
        %p300 = pneg %p102
        %p301 = pneg %p99
        %p302 = scmp.lt.s32.totalorder %s17, 1
        %s303 = scalar_select %p302, %s17, 1
        %s304 = smul.addr %s303, 2
        %s305 = scalar_lea.vmem %s2, %s304
        %s306 = smul.u32 4, %s18
        %s307 = smul.u32 4, %s18
        %p308 = scmp.lt.s32.totalorder %s17, 1
        %s309 = scalar_select %p308, %s17, 1
        %s310 = smul.addr %s309, 2
        %s311 = scalar_lea.vmem %s2, %s310
        %p312 = scmp.eq.s32.totalorder %s18, 0
        // Predicated region
        $region105: #{_efdm_loss_impl.7} parent=95 // pred_check
          %p313 = pneg %p312
        $region106: #{_efdm_loss_impl.7} parent=95 // pred_check_branch
          %315 = sbr.rel (%p313) target = $region108
        $region107: #{_efdm_loss_impl.7} parent=95 // pred_region
          %316 = vst [vmem:[#allocation2] sm:$0xff] 0.0
          %317 = vst [vmem:[#allocation2 + $0x8] sm:$0xff] 0.0
          %318 = vst [vmem:[#allocation2 + $0x10] sm:$0xff] 0.0
          %319 = vst [vmem:[#allocation2 + $0x18] sm:$0xff] 0.0
        $region108: #{_efdm_loss_impl.7} parent=95 // pred_fallthru
          _
        %v320 = vld [vmem:[%s277] sm:$0xff]
        %v321 = vld [vmem:[%s277 + $0x8] sm:$0xff]
        %v322 = vld [vmem:[%s277 + $0x10] sm:$0xff]
        %v323 = vld [vmem:[%s277 + $0x18] sm:$0xff]
        %v324 = vld [vmem:[%s284] sm:$0xff]
        %v325 = vld [vmem:[%s284 + $0x8] sm:$0xff]
        %v326 = vld [vmem:[%s284 + $0x10] sm:$0xff]
        %v327 = vld [vmem:[%s284 + $0x18] sm:$0xff]
        %v328 = vsub.f32 %v320, %v324
        %v329 = vsub.f32 %v321, %v325
        %v330 = vsub.f32 %v322, %v326
        %v331 = vsub.f32 %v323, %v327
        %v332 = vmul.f32 %v328, %v328
        %v333 = vmul.f32 %v329, %v329
        %v334 = vmul.f32 %v330, %v330
        %v335 = vmul.f32 %v331, %v331
        %v336 = vadd.f32 %v332, %v333
        %v337 = vadd.f32 %v336, %v334
        %v338 = vadd.f32 %v337, %v335
        %s339 = scalar_lea.vmem %s284, 32 [#allocation4]
        %v340 = vld [vmem:[%s339] sm:$0xff]
        %v341 = vld [vmem:[%s339 + $0x8] sm:$0xff]
        %v342 = vld [vmem:[%s339 + $0x10] sm:$0xff]
        %v343 = vld [vmem:[%s339 + $0x18] sm:$0xff]
        %v344 = vsub.f32 %v320, %v340
        %v345 = vsub.f32 %v321, %v341
        %v346 = vsub.f32 %v322, %v342
        %v347 = vsub.f32 %v323, %v343
        %v348 = vmul.f32 %v344, %v344
        %v349 = vmul.f32 %v345, %v345
        %v350 = vmul.f32 %v346, %v346
        %v351 = vmul.f32 %v347, %v347
        %v352 = vadd.f32 %v348, %v349
        %v353 = vadd.f32 %v352, %v350
        %v354 = vadd.f32 %v353, %v351
        %s355 = scalar_lea.vmem %s277, 32 [#allocation3]
        %v356 = vld [vmem:[%s355] sm:$0xff]
        %v357 = vld [vmem:[%s355 + $0x8] sm:$0xff]
        %v358 = vld [vmem:[%s355 + $0x10] sm:$0xff]
        %v359 = vld [vmem:[%s355 + $0x18] sm:$0xff]
        %v360 = vsub.f32 %v356, %v324
        %v361 = vsub.f32 %v357, %v325
        %v362 = vsub.f32 %v358, %v326
        %v363 = vsub.f32 %v359, %v327
        %v364 = vmul.f32 %v360, %v360
        %v365 = vmul.f32 %v361, %v361
        %v366 = vmul.f32 %v362, %v362
        %v367 = vmul.f32 %v363, %v363
        %v368 = vadd.f32 %v364, %v365
        %v369 = vadd.f32 %v368, %v366
        %v370 = vadd.f32 %v369, %v367
        %v371 = vsub.f32 %v356, %v340
        %v372 = vsub.f32 %v357, %v341
        %v373 = vsub.f32 %v358, %v342
        %v374 = vsub.f32 %v359, %v343
        %v375 = vmul.f32 %v371, %v371
        %v376 = vmul.f32 %v372, %v372
        %v377 = vmul.f32 %v373, %v373
        %v378 = vmul.f32 %v374, %v374
        %v379 = vadd.f32 %v375, %v376
        %v380 = vadd.f32 %v379, %v377
        %v381 = vadd.f32 %v380, %v378
        %v382 = vld [vmem:[#allocation2] sm:$0xff]
        %v383 = vld [vmem:[#allocation2 + $0x8] sm:$0xff]
        %v384 = vld [vmem:[#allocation2 + $0x10] sm:$0xff]
        %v385 = vld [vmem:[#allocation2 + $0x18] sm:$0xff]
        %v386 = vadd.f32 %v382, %v338
        %v387 = vadd.f32 %v383, %v354
        %v388 = vadd.f32 %v384, %v370
        %v389 = vadd.f32 %v385, %v381
        %390 = vst [vmem:[#allocation2] sm:$0xff] %v386
        %391 = vst [vmem:[#allocation2 + $0x8] sm:$0xff] %v387
        %392 = vst [vmem:[#allocation2 + $0x10] sm:$0xff] %v388
        %393 = vst [vmem:[#allocation2 + $0x18] sm:$0xff] %v389
        %p394 = scmp.eq.s32.totalorder %s18, 1
        // Predicated region
        $region109: #{_efdm_loss_impl.7} parent=95 // pred_check
          %p395 = pneg %p394
        $region110: #{_efdm_loss_impl.7} parent=95 // pred_check_branch
          %397 = sbr.rel (%p395) target = $region112
        $region111: #{_efdm_loss_impl.7} parent=95 // pred_region
          %v398 = vld [vmem:[#allocation2] sm:$0xff]
          %v399 = vld [vmem:[#allocation2 + $0x8] sm:$0xff]
          %v400 = vld [vmem:[#allocation2 + $0x10] sm:$0xff]
          %v401 = vld [vmem:[#allocation2 + $0x18] sm:$0xff]
          %v402 = vrot.slane %v398, 4
          %v403 = vadd.f32 %v398, %v402
          %v404 = vrot.slane %v403, 2
          %v405 = vadd.f32 %v403, %v404
          %v406 = vrot.slane %v405, 1
          %v407 = vadd.f32 %v405, %v406
          %v408 = vrot.slane %v399, 4
          %v409 = vadd.f32 %v399, %v408
          %v410 = vrot.slane %v409, 2
          %v411 = vadd.f32 %v409, %v410
          %v412 = vrot.slane %v411, 1
          %v413 = vadd.f32 %v411, %v412
          %v414 = vrot.slane %v400, 4
          %v415 = vadd.f32 %v400, %v414
          %v416 = vrot.slane %v415, 2
          %v417 = vadd.f32 %v415, %v416
          %v418 = vrot.slane %v417, 1
          %v419 = vadd.f32 %v417, %v418
          %v420 = vrot.slane %v401, 4
          %v421 = vadd.f32 %v401, %v420
          %v422 = vrot.slane %v421, 2
          %v423 = vadd.f32 %v421, %v422
          %v424 = vrot.slane %v423, 1
          %v425 = vadd.f32 %v423, %v424
          %vm430 = vcmask 1041409
          %v431 = vsel %vm430, %v413, %v407
          %v432 = vsel %vm430, %v425, %v419
          %vm435 = vcmask 1041408
          %v436 = vsel %vm435, %v431, 0.0
          %437 = vadd.xlane.f32.xlu0 %v436
          %v438 = vpop.xlane.xlu0 %437
          %v439 = vsel %vm435, %v432, 0.0
          %440 = vadd.xlane.f32.xlu0 %v439
          %v441 = vpop.xlane.xlu0 %440
          %v444 = vlaneseq
          %v445 = vand.u32 %v444, 127
          %v446 = vperm.slane %v438, %v445
          %v447 = vperm.slane %v441, %v445
          %v448 = vsel %vm430, %v447, %v446
          %vm450 = vcmask 9216
          %451 = vst.msk [vmem:[%s311] sm:$0x3] %vm450, %v448
        $region112: #{_efdm_loss_impl.7} parent=95 // pred_fallthru
          _
        %p452 = scmp.lt.s32.totalorder %s17, 1
        %s453 = scalar_select %p452, %s17, 1
        %s454 = smul.addr %s453, 2
        %s455 = scalar_lea.vmem %s2, %s454
        // Predicated region
        $region113: #{_efdm_loss_impl.7} parent=95 // pred_check
          %p456 = pneg %p99
        $region114: #{_efdm_loss_impl.7} parent=95 // pred_check_branch
          %458 = sbr.rel (%p456) target = $region116
        $region115: #{_efdm_loss_impl.7} parent=95 // pred_region
          _
        $region116: #{_efdm_loss_impl.7} parent=95 // pred_fallthru
          _
      $region96: #{_efdm_loss_impl.7} parent=5 // pred_fallthru
        _
      %p459 = scmp.le.s32.totalorder 2, %s8
      // Predicated region
      $region117: #{_efdm_loss_impl.7} parent=5 // pred_check
        %p460 = pneg %p459
      $region118: #{_efdm_loss_impl.7} parent=5 // pred_check_branch
        %462 = sbr.rel (%p460) target = $region120
      $region119: #{_efdm_loss_impl.7} parent=5 // pred_region
        %s463 = ssub.s32 %s8, 2
        // Predicated region
        $region121: #{_efdm_loss_impl.7} parent=119 // pred_check
          %p464 = pneg %p105
        $region122: #{_efdm_loss_impl.7} parent=119 // pred_check_branch
          %466 = sbr.rel (%p464) target = $region124
        $region123: #{_efdm_loss_impl.7} parent=119 // pred_region
          %p467 = scmp.lt.s32.totalorder %s19, 1
          %s468 = scalar_select %p467, %s19, 1
          %s469 = smul.addr %s468, 2
          %s470 = scalar_lea.vmem %s2, %s469
        $region124: #{_efdm_loss_impl.7} parent=119 // pred_fallthru
          _
      $region120: #{_efdm_loss_impl.7} parent=5 // pred_fallthru
        _
    $region6: #{_efdm_loss_impl.7} parent=1 // loop_footer
      %s12 = sadd.s32 1, %s8
    $region7: #{_efdm_loss_impl.7} parent=1 // loop_footer_branch
      %7 = sbr.rel target = $region3
    $region8: #{_efdm_loss_impl.7} parent=1 // loop_exit
      _

// kernel: _efdm_loss_impl.6
$region0: #{_efdm_loss_impl.6}
  #allocation0 [shape = 'u32[]', space=smem, size = 0x4, offset = 0x4, fixed_abs, tag = 'smem constant byte address 0x4 - core index']
  #allocation1 [shape = 'u32[72,128]{1,0:T(1,128)}', space=vmem, size = 0x9000, scoped, tag = 'internal scratch']
  #allocation2 [shape = 'f32[2,2,8,128]{3,2,1,0:T(8,128)}', space=vmem, size = 0x4000, scoped, tag = 'scratch operand']
  %s0 = inlined_call_operand.vmem [shape: f32[2,2,32,128], index: 0, kind: input, shape index: {}]
  %s1 = inlined_call_operand.vmem [shape: f32[2,2,32,128], index: 1, kind: input, shape index: {}]
  %s2 = inlined_call_operand.vmem [shape: f32[2,2,2], index: 2, kind: output, shape index: {}]
  %s3 = sld [smem:[#allocation0]]
  $region49: #{_efdm_loss_impl.6} parent=0
    _
  %s5 = ssub.s32 1, %s3
  %s6 = scalar_select 0, %s5, %s3
  loop: start=0, step=1, limit=4
  $region2: #{_efdm_loss_impl.6} parent=0 // loop_pre_header
    _
  $region3: #{_efdm_loss_impl.6} parent=0 // loop_header
    %s8 = sphi 0, %s12
    %p9 = scmp.ge.s32.totalorder %s8, 4
    %s15 = sphi 0, %s27
    %s16 = sphi 0, %s23
    %s17 = sphi 0, %s15
    %s18 = sphi 0, %s16
    %s19 = sphi 0, %s17
    %s20 = sphi 0, %s18
    %s32 = sphi 0, %s34
    %s35 = sphi 0, %s32
    %s36 = sphi 0, %s35
    %s52 = sphi 0, %s36
    %s60 = sphi 0, %s62
    %s63 = sphi 0, %s60
    %s64 = sphi 0, %s63
    %s80 = sphi 0, %s64
    %s86 = sphi 0, %s88
    %s89 = sphi 0, %s86
    %s90 = sphi 0, %s89
    %s106 = sphi 0, %s90
  $region4: #{_efdm_loss_impl.6} parent=0 // loop_header_branch
    %11 = sbr.rel (%p9) target = $region8
  $region5: #{_efdm_loss_impl.6} parent=0 // loop_body
    %s13 = ssub.s32 %s8, 1
    %s14 = ssub.s32 %s8, 2
    %s21 = sadd.s32 1, %s16
    %p22 = scmp.ge.s32.totalorder %s21, 1
    %s23 = scalar_select %p22, 0, %s21
    %s24 = sadd.s32 1, %s15
    %s25 = scalar_select %p22, %s24, %s15
    %p26 = scmp.ge.s32.totalorder %s25, 2
    %s27 = scalar_select %p26, 0, %s25
    %s28 = ssub.s32 %s15, %s27
    %s29 = ssub.s32 %s16, %s23
    %s30 = sor.u32 %s28, %s29
    %p31 = scmp.eq.s32.totalorder %s30, 0
    %s33 = sadd.s32 %s32, 1
    %s34 = scalar_select %p31, %s32, %s33
    %p37 = pneg %p31
    %p38 = scmp.eq.s32.totalorder %s8, 1
    %p39 = por %p37, %p38
    %p40 = scmp.ne.s32.totalorder %s32, %s35
    %p41 = scmp.eq.s32.totalorder %s8, 0
    %p42 = por %p40, %p41
    %p43 = scmp.ne.s32.totalorder %s32, %s35
    %p44 = scmp.eq.s32.totalorder %s13, 1
    %p45 = por %p43, %p44
    %p46 = scmp.ne.s32.totalorder %s35, %s36
    %p47 = scmp.eq.s32.totalorder %s13, 0
    %p48 = por %p46, %p47
    %p49 = scmp.ne.s32.totalorder %s35, %s36
    %p50 = scmp.eq.s32.totalorder %s14, 1
    %p51 = por %p49, %p50
    %p53 = scmp.ne.s32.totalorder %s36, %s52
    %p54 = scmp.eq.s32.totalorder %s14, 0
    %p55 = por %p53, %p54
    %s56 = ssub.s32 %s15, %s27
    %s57 = ssub.s32 %s16, %s23
    %s58 = sor.u32 %s56, %s57
    %p59 = scmp.eq.s32.totalorder %s58, 0
    %s61 = sadd.s32 %s60, 1
    %s62 = scalar_select %p59, %s60, %s61
    %p65 = pneg %p59
    %p66 = scmp.eq.s32.totalorder %s8, 1
    %p67 = por %p65, %p66
    %p68 = scmp.ne.s32.totalorder %s60, %s63
    %p69 = scmp.eq.s32.totalorder %s8, 0
    %p70 = por %p68, %p69
    %p71 = scmp.ne.s32.totalorder %s60, %s63
    %p72 = scmp.eq.s32.totalorder %s13, 1
    %p73 = por %p71, %p72
    %p74 = scmp.ne.s32.totalorder %s63, %s64
    %p75 = scmp.eq.s32.totalorder %s13, 0
    %p76 = por %p74, %p75
    %p77 = scmp.ne.s32.totalorder %s63, %s64
    %p78 = scmp.eq.s32.totalorder %s14, 1
    %p79 = por %p77, %p78
    %p81 = scmp.ne.s32.totalorder %s64, %s80
    %p82 = scmp.eq.s32.totalorder %s14, 0
    %p83 = por %p81, %p82
    %s84 = ssub.s32 %s15, %s27
    %p85 = scmp.eq.s32.totalorder %s84, 0
    %s87 = sadd.s32 %s86, 1
    %s88 = scalar_select %p85, %s86, %s87
    %p91 = pneg %p85
    %p92 = scmp.eq.s32.totalorder %s8, 1
    %p93 = por %p91, %p92
    %p94 = scmp.ne.s32.totalorder %s86, %s89
    %p95 = scmp.eq.s32.totalorder %s8, 0
    %p96 = por %p94, %p95
    %p97 = scmp.ne.s32.totalorder %s86, %s89
    %p98 = scmp.eq.s32.totalorder %s13, 1
    %p99 = por %p97, %p98
    %p100 = scmp.ne.s32.totalorder %s89, %s90
    %p101 = scmp.eq.s32.totalorder %s13, 0
    %p102 = por %p100, %p101
    %p103 = scmp.ne.s32.totalorder %s89, %s90
    %p104 = scmp.eq.s32.totalorder %s14, 1
    %p105 = por %p103, %p104
    %p107 = scmp.ne.s32.totalorder %s90, %s106
    %p108 = scmp.eq.s32.totalorder %s14, 0
    %p109 = por %p107, %p108
    %p110 = scmp.le.s32.totalorder 1, %s8
    %p111 = scmp.lt.s32.totalorder %s8, 3
    %p112 = pnand %p110, %p111
    %p113 = pneg %p112
    // Predicated region
    $region9: #{_efdm_loss_impl.6} parent=5 // pred_check
      _
    $region10: #{_efdm_loss_impl.6} parent=5 // pred_check_branch
      %115 = sbr.rel (%p112) target = $region12
    $region11: #{_efdm_loss_impl.6} parent=5 // pred_region
      %s116 = ssub.s32 %s8, 1
    $region12: #{_efdm_loss_impl.6} parent=5 // pred_fallthru
      _
    %p117 = scmp.lt.s32.totalorder %s8, 2
    // Predicated region
    $region13: #{_efdm_loss_impl.6} parent=5 // pred_check
      %p118 = pneg %p117
    $region14: #{_efdm_loss_impl.6} parent=5 // pred_check_branch
      %120 = sbr.rel (%p118) target = $region16
    $region15: #{_efdm_loss_impl.6} parent=5 // pred_region
      // Predicated region
      $region17: #{_efdm_loss_impl.6} parent=15 // pred_check
        %p121 = pneg %p42
      $region18: #{_efdm_loss_impl.6} parent=15 // pred_check_branch
        %123 = sbr.rel (%p121) target = $region20
      $region19: #{_efdm_loss_impl.6} parent=15 // pred_region
        %s124 = smul.u32 4, %s16
        %p125 = scmp.lt.s32.totalorder %s15, 1
        %s126 = scalar_select %p125, %s15, 1
        %p127 = scmp.lt.s32.totalorder %s124, 3
        %s128 = scalar_select %p127, %s124, 3
        %s129 = smul.addr %s126, 8
        %s130 = sadd.s32 %s128, %s129
        %s131 = smul.addr %s130, 8
        %s132 = scalar_lea.vmem %s0, %s131
        %s133 = smul.u32 4, %s16
      $region20: #{_efdm_loss_impl.6} parent=15 // pred_fallthru
        _
      // Predicated region
      $region21: #{_efdm_loss_impl.6} parent=15 // pred_check
        %p134 = pneg %p70
      $region22: #{_efdm_loss_impl.6} parent=15 // pred_check_branch
        %136 = sbr.rel (%p134) target = $region24
      $region23: #{_efdm_loss_impl.6} parent=15 // pred_region
        %s137 = smul.u32 4, %s16
        %p138 = scmp.lt.s32.totalorder %s15, 1
        %s139 = scalar_select %p138, %s15, 1
        %p140 = scmp.lt.s32.totalorder %s137, 3
        %s141 = scalar_select %p140, %s137, 3
        %s142 = smul.addr %s139, 8
        %s143 = sadd.s32 %s141, %s142
        %s144 = smul.addr %s143, 8
        %s145 = scalar_lea.vmem %s1, %s144
        %s146 = smul.u32 4, %s16
      $region24: #{_efdm_loss_impl.6} parent=15 // pred_fallthru
        _
    $region16: #{_efdm_loss_impl.6} parent=5 // pred_fallthru
      _
    %p147 = scmp.le.s32.totalorder 1, %s8
    %p148 = scmp.lt.s32.totalorder %s8, 3
    %p149 = pnand %p147, %p148
    %p150 = pneg %p149
    // Predicated region
    $region25: #{_efdm_loss_impl.6} parent=5 // pred_check
      _
    $region26: #{_efdm_loss_impl.6} parent=5 // pred_check_branch
      %152 = sbr.rel (%p149) target = $region28
    $region27: #{_efdm_loss_impl.6} parent=5 // pred_region
      %s153 = ssub.s32 %s8, 1
      %s154 = smul.u32 4, %s18
      %p155 = scmp.lt.s32.totalorder %s17, 1
      %s156 = scalar_select %p155, %s17, 1
      %p157 = scmp.lt.s32.totalorder %s154, 3
      %s158 = scalar_select %p157, %s154, 3
      %s159 = smul.addr %s156, 8
      %s160 = sadd.s32 %s158, %s159
      %s161 = smul.addr %s160, 8
      %s162 = scalar_lea.vmem %s0, %s161
      %p163 = pneg %p48
      %p164 = pneg %p45
      %s165 = smul.u32 4, %s18
      %p166 = scmp.lt.s32.totalorder %s17, 1
      %s167 = scalar_select %p166, %s17, 1
      %p168 = scmp.lt.s32.totalorder %s165, 3
      %s169 = scalar_select %p168, %s165, 3
      %s170 = smul.addr %s167, 8
      %s171 = sadd.s32 %s169, %s170
      %s172 = smul.addr %s171, 8
      %s173 = scalar_lea.vmem %s1, %s172
      %p174 = pneg %p76
      %p175 = pneg %p73
      %p176 = pneg %p102
      %p177 = pneg %p99
      %p178 = scmp.lt.s32.totalorder %s17, 1
      %s179 = scalar_select %p178, %s17, 1
      %s180 = smul.addr %s179, 2
      %s181 = scalar_lea.vmem %s2, %s180
      %s182 = smul.u32 4, %s18
      %p183 = scmp.lt.s32.totalorder %s17, 1
      %s184 = scalar_select %p183, %s17, 1
      %p185 = scmp.lt.s32.totalorder %s182, 3
      %s186 = scalar_select %p185, %s182, 3
      %s187 = smul.addr %s184, 8
      %s188 = sadd.s32 %s186, %s187
      %s189 = smul.addr %s188, 8
      %s190 = scalar_lea.vmem %s0, %s189
      %s191 = smul.u32 4, %s18
      %s192 = smul.u32 4, %s18
      %p193 = scmp.lt.s32.totalorder %s17, 1
      %s194 = scalar_select %p193, %s17, 1
      %p195 = scmp.lt.s32.totalorder %s192, 3
      %s196 = scalar_select %p195, %s192, 3
      %s197 = smul.addr %s194, 8
      %s198 = sadd.s32 %s196, %s197
      %s199 = smul.addr %s198, 8
      %s200 = scalar_lea.vmem %s1, %s199
      %s201 = smul.u32 4, %s18
      %p202 = scmp.lt.s32.totalorder %s17, 1
      %s203 = scalar_select %p202, %s17, 1
      %s204 = smul.addr %s203, 2
      %s205 = scalar_lea.vmem %s2, %s204
      %p206 = scmp.eq.s32.totalorder %s18, 0
      // Predicated region
      $region29: #{_efdm_loss_impl.6} parent=27 // pred_check
        %p207 = pneg %p206
      $region30: #{_efdm_loss_impl.6} parent=27 // pred_check_branch
        %209 = sbr.rel (%p207) target = $region32
      $region31: #{_efdm_loss_impl.6} parent=27 // pred_region
        %210 = vst [vmem:[#allocation2] sm:$0xff] 0.0
        %211 = vst [vmem:[#allocation2 + $0x8] sm:$0xff] 0.0
        %212 = vst [vmem:[#allocation2 + $0x10] sm:$0xff] 0.0
        %213 = vst [vmem:[#allocation2 + $0x18] sm:$0xff] 0.0
      $region32: #{_efdm_loss_impl.6} parent=27 // pred_fallthru
        _
      %v214 = vld [vmem:[%s190] sm:$0xff]
      %v215 = vld [vmem:[%s190 + $0x8] sm:$0xff]
      %v216 = vld [vmem:[%s190 + $0x10] sm:$0xff]
      %v217 = vld [vmem:[%s190 + $0x18] sm:$0xff]
      %v218 = vld [vmem:[%s200] sm:$0xff]
      %v219 = vld [vmem:[%s200 + $0x8] sm:$0xff]
      %v220 = vld [vmem:[%s200 + $0x10] sm:$0xff]
      %v221 = vld [vmem:[%s200 + $0x18] sm:$0xff]
      %v222 = vsub.f32 %v214, %v218
      %v223 = vsub.f32 %v215, %v219
      %v224 = vsub.f32 %v216, %v220
      %v225 = vsub.f32 %v217, %v221
      %v226 = vmul.f32 %v222, %v222
      %v227 = vmul.f32 %v223, %v223
      %v228 = vmul.f32 %v224, %v224
      %v229 = vmul.f32 %v225, %v225
      %v230 = vadd.f32 %v226, %v227
      %v231 = vadd.f32 %v230, %v228
      %v232 = vadd.f32 %v231, %v229
      %s233 = scalar_lea.vmem %s200, 32
      %v234 = vld [vmem:[%s233] sm:$0xff]
      %v235 = vld [vmem:[%s233 + $0x8] sm:$0xff]
      %v236 = vld [vmem:[%s233 + $0x10] sm:$0xff]
      %v237 = vld [vmem:[%s233 + $0x18] sm:$0xff]
      %v238 = vsub.f32 %v214, %v234
      %v239 = vsub.f32 %v215, %v235
      %v240 = vsub.f32 %v216, %v236
      %v241 = vsub.f32 %v217, %v237
      %v242 = vmul.f32 %v238, %v238
      %v243 = vmul.f32 %v239, %v239
      %v244 = vmul.f32 %v240, %v240
      %v245 = vmul.f32 %v241, %v241
      %v246 = vadd.f32 %v242, %v243
      %v247 = vadd.f32 %v246, %v244
      %v248 = vadd.f32 %v247, %v245
      %s249 = scalar_lea.vmem %s190, 32
      %v250 = vld [vmem:[%s249] sm:$0xff]
      %v251 = vld [vmem:[%s249 + $0x8] sm:$0xff]
      %v252 = vld [vmem:[%s249 + $0x10] sm:$0xff]
      %v253 = vld [vmem:[%s249 + $0x18] sm:$0xff]
      %v254 = vsub.f32 %v250, %v218
      %v255 = vsub.f32 %v251, %v219
      %v256 = vsub.f32 %v252, %v220
      %v257 = vsub.f32 %v253, %v221
      %v258 = vmul.f32 %v254, %v254
      %v259 = vmul.f32 %v255, %v255
      %v260 = vmul.f32 %v256, %v256
      %v261 = vmul.f32 %v257, %v257
      %v262 = vadd.f32 %v258, %v259
      %v263 = vadd.f32 %v262, %v260
      %v264 = vadd.f32 %v263, %v261
      %v265 = vsub.f32 %v250, %v234
      %v266 = vsub.f32 %v251, %v235
      %v267 = vsub.f32 %v252, %v236
      %v268 = vsub.f32 %v253, %v237
      %v269 = vmul.f32 %v265, %v265
      %v270 = vmul.f32 %v266, %v266
      %v271 = vmul.f32 %v267, %v267
      %v272 = vmul.f32 %v268, %v268
      %v273 = vadd.f32 %v269, %v270
      %v274 = vadd.f32 %v273, %v271
      %v275 = vadd.f32 %v274, %v272
      %v276 = vld [vmem:[#allocation2] sm:$0xff]
      %v277 = vld [vmem:[#allocation2 + $0x8] sm:$0xff]
      %v278 = vld [vmem:[#allocation2 + $0x10] sm:$0xff]
      %v279 = vld [vmem:[#allocation2 + $0x18] sm:$0xff]
      %v280 = vadd.f32 %v276, %v232
      %v281 = vadd.f32 %v277, %v248
      %v282 = vadd.f32 %v278, %v264
      %v283 = vadd.f32 %v279, %v275
      %284 = vst [vmem:[#allocation2] sm:$0xff] %v280
      %285 = vst [vmem:[#allocation2 + $0x8] sm:$0xff] %v281
      %286 = vst [vmem:[#allocation2 + $0x10] sm:$0xff] %v282
      %287 = vst [vmem:[#allocation2 + $0x18] sm:$0xff] %v283
      // Predicated region
      $region33: #{_efdm_loss_impl.6} parent=27 // pred_check
        %p288 = pneg %p206
      $region34: #{_efdm_loss_impl.6} parent=27 // pred_check_branch
        %290 = sbr.rel (%p288) target = $region36
      $region35: #{_efdm_loss_impl.6} parent=27 // pred_region
        %v291 = vld [vmem:[#allocation2] sm:$0xff]
        %v292 = vld [vmem:[#allocation2 + $0x8] sm:$0xff]
        %v293 = vld [vmem:[#allocation2 + $0x10] sm:$0xff]
        %v294 = vld [vmem:[#allocation2 + $0x18] sm:$0xff]
        %v295 = vrot.slane %v291, 4
        %v296 = vadd.f32 %v291, %v295
        %v297 = vrot.slane %v296, 2
        %v298 = vadd.f32 %v296, %v297
        %v299 = vrot.slane %v298, 1
        %v300 = vadd.f32 %v298, %v299
        %v301 = vrot.slane %v292, 4
        %v302 = vadd.f32 %v292, %v301
        %v303 = vrot.slane %v302, 2
        %v304 = vadd.f32 %v302, %v303
        %v305 = vrot.slane %v304, 1
        %v306 = vadd.f32 %v304, %v305
        %v307 = vrot.slane %v293, 4
        %v308 = vadd.f32 %v293, %v307
        %v309 = vrot.slane %v308, 2
        %v310 = vadd.f32 %v308, %v309
        %v311 = vrot.slane %v310, 1
        %v312 = vadd.f32 %v310, %v311
        %v313 = vrot.slane %v294, 4
        %v314 = vadd.f32 %v294, %v313
        %v315 = vrot.slane %v314, 2
        %v316 = vadd.f32 %v314, %v315
        %v317 = vrot.slane %v316, 1
        %v318 = vadd.f32 %v316, %v317
        %vm323 = vcmask 1041409
        %v324 = vsel %vm323, %v306, %v300
        %v325 = vsel %vm323, %v318, %v312
        %vm328 = vcmask 1041408
        %v329 = vsel %vm328, %v324, 0.0
        %330 = vadd.xlane.f32.xlu0 %v329
        %v331 = vpop.xlane.xlu0 %330
        %v332 = vsel %vm328, %v325, 0.0
        %333 = vadd.xlane.f32.xlu0 %v332
        %v334 = vpop.xlane.xlu0 %333
        %v337 = vlaneseq
        %v338 = vand.u32 %v337, 127
        %v339 = vperm.slane %v331, %v338
        %v340 = vperm.slane %v334, %v338
        %v341 = vsel %vm323, %v340, %v339
        %vm343 = vcmask 9216
        %344 = vst.msk [vmem:[%s205] sm:$0x3] %vm343, %v341
      $region36: #{_efdm_loss_impl.6} parent=27 // pred_fallthru
        _
      %p345 = scmp.lt.s32.totalorder %s17, 1
      %s346 = scalar_select %p345, %s17, 1
      %s347 = smul.addr %s346, 2
      %s348 = scalar_lea.vmem %s2, %s347
      // Predicated region
      $region37: #{_efdm_loss_impl.6} parent=27 // pred_check
        %p349 = pneg %p99
      $region38: #{_efdm_loss_impl.6} parent=27 // pred_check_branch
        %351 = sbr.rel (%p349) target = $region40
      $region39: #{_efdm_loss_impl.6} parent=27 // pred_region
        _
      $region40: #{_efdm_loss_impl.6} parent=27 // pred_fallthru
        _
    $region28: #{_efdm_loss_impl.6} parent=5 // pred_fallthru
      _
    %p352 = scmp.le.s32.totalorder 2, %s8
    // Predicated region
    $region41: #{_efdm_loss_impl.6} parent=5 // pred_check
      %p353 = pneg %p352
    $region42: #{_efdm_loss_impl.6} parent=5 // pred_check_branch
      %355 = sbr.rel (%p353) target = $region44
    $region43: #{_efdm_loss_impl.6} parent=5 // pred_region
      %s356 = ssub.s32 %s8, 2
      // Predicated region
      $region45: #{_efdm_loss_impl.6} parent=43 // pred_check
        %p357 = pneg %p105
      $region46: #{_efdm_loss_impl.6} parent=43 // pred_check_branch
        %359 = sbr.rel (%p357) target = $region48
      $region47: #{_efdm_loss_impl.6} parent=43 // pred_region
        %p360 = scmp.lt.s32.totalorder %s19, 1
        %s361 = scalar_select %p360, %s19, 1
        %s362 = smul.addr %s361, 2
        %s363 = scalar_lea.vmem %s2, %s362
      $region48: #{_efdm_loss_impl.6} parent=43 // pred_fallthru
        _
    $region44: #{_efdm_loss_impl.6} parent=5 // pred_fallthru
      _
  $region6: #{_efdm_loss_impl.6} parent=0 // loop_footer
    %s12 = sadd.s32 1, %s8
  $region7: #{_efdm_loss_impl.6} parent=0 // loop_footer_branch
    %7 = sbr.rel target = $region3
  $region8: #{_efdm_loss_impl.6} parent=0 // loop_exit
    _

// kernel: _efdm_loss_impl.8
$region0: #{_efdm_loss_impl.8}
  #allocation0 [shape = 'u32[]', space=smem, size = 0x4, offset = 0x4, fixed_abs, tag = 'smem constant byte address 0x4 - core index']
  #allocation1 [shape = 'u32[72,128]{1,0:T(1,128)}', space=vmem, size = 0x9000, scoped, tag = 'internal scratch']
  #allocation2 [shape = 'f32[2,2,8,128]{3,2,1,0:T(8,128)}', space=vmem, size = 0x4000, scoped, tag = 'scratch operand']
  %s0 = inlined_call_operand.vmem [shape: f32[3,2,16,128], index: 0, kind: input, shape index: {}]
  %s1 = inlined_call_operand.vmem [shape: f32[3,2,16,128], index: 1, kind: input, shape index: {}]
  %s2 = inlined_call_operand.vmem [shape: f32[3,2,2], index: 2, kind: output, shape index: {}]
  %s3 = sld [smem:[#allocation0]]
  $region49: #{_efdm_loss_impl.8} parent=0
    _
  %s5 = ssub.s32 1, %s3
  %s6 = scalar_select 0, %s5, %s3
  loop: start=0, step=1, limit=5
  $region2: #{_efdm_loss_impl.8} parent=0 // loop_pre_header
    _
  $region3: #{_efdm_loss_impl.8} parent=0 // loop_header
    %s8 = sphi 0, %s12
    %p9 = scmp.ge.s32.totalorder %s8, 5
    %s15 = sphi 0, %s27
    %s16 = sphi 0, %s23
    %s17 = sphi 0, %s15
    %s18 = sphi 0, %s16
    %s19 = sphi 0, %s17
    %s20 = sphi 0, %s18
    %s32 = sphi 0, %s34
    %s35 = sphi 0, %s32
    %s36 = sphi 0, %s35
    %s52 = sphi 0, %s36
    %s60 = sphi 0, %s62
    %s63 = sphi 0, %s60
    %s64 = sphi 0, %s63
    %s80 = sphi 0, %s64
    %s86 = sphi 0, %s88
    %s89 = sphi 0, %s86
    %s90 = sphi 0, %s89
    %s106 = sphi 0, %s90
  $region4: #{_efdm_loss_impl.8} parent=0 // loop_header_branch
    %11 = sbr.rel (%p9) target = $region8
  $region5: #{_efdm_loss_impl.8} parent=0 // loop_body
    %s13 = ssub.s32 %s8, 1
    %s14 = ssub.s32 %s8, 2
    %s21 = sadd.s32 1, %s16
    %p22 = scmp.ge.s32.totalorder %s21, 1
    %s23 = scalar_select %p22, 0, %s21
    %s24 = sadd.s32 1, %s15
    %s25 = scalar_select %p22, %s24, %s15
    %p26 = scmp.ge.s32.totalorder %s25, 3
    %s27 = scalar_select %p26, 0, %s25
    %s28 = ssub.s32 %s15, %s27
    %s29 = ssub.s32 %s16, %s23
    %s30 = sor.u32 %s28, %s29
    %p31 = scmp.eq.s32.totalorder %s30, 0
    %s33 = sadd.s32 %s32, 1
    %s34 = scalar_select %p31, %s32, %s33
    %p37 = pneg %p31
    %p38 = scmp.eq.s32.totalorder %s8, 2
    %p39 = por %p37, %p38
    %p40 = scmp.ne.s32.totalorder %s32, %s35
    %p41 = scmp.eq.s32.totalorder %s8, 0
    %p42 = por %p40, %p41
    %p43 = scmp.ne.s32.totalorder %s32, %s35
    %p44 = scmp.eq.s32.totalorder %s13, 2
    %p45 = por %p43, %p44
    %p46 = scmp.ne.s32.totalorder %s35, %s36
    %p47 = scmp.eq.s32.totalorder %s13, 0
    %p48 = por %p46, %p47
    %p49 = scmp.ne.s32.totalorder %s35, %s36
    %p50 = scmp.eq.s32.totalorder %s14, 2
    %p51 = por %p49, %p50
    %p53 = scmp.ne.s32.totalorder %s36, %s52
    %p54 = scmp.eq.s32.totalorder %s14, 0
    %p55 = por %p53, %p54
    %s56 = ssub.s32 %s15, %s27
    %s57 = ssub.s32 %s16, %s23
    %s58 = sor.u32 %s56, %s57
    %p59 = scmp.eq.s32.totalorder %s58, 0
    %s61 = sadd.s32 %s60, 1
    %s62 = scalar_select %p59, %s60, %s61
    %p65 = pneg %p59
    %p66 = scmp.eq.s32.totalorder %s8, 2
    %p67 = por %p65, %p66
    %p68 = scmp.ne.s32.totalorder %s60, %s63
    %p69 = scmp.eq.s32.totalorder %s8, 0
    %p70 = por %p68, %p69
    %p71 = scmp.ne.s32.totalorder %s60, %s63
    %p72 = scmp.eq.s32.totalorder %s13, 2
    %p73 = por %p71, %p72
    %p74 = scmp.ne.s32.totalorder %s63, %s64
    %p75 = scmp.eq.s32.totalorder %s13, 0
    %p76 = por %p74, %p75
    %p77 = scmp.ne.s32.totalorder %s63, %s64
    %p78 = scmp.eq.s32.totalorder %s14, 2
    %p79 = por %p77, %p78
    %p81 = scmp.ne.s32.totalorder %s64, %s80
    %p82 = scmp.eq.s32.totalorder %s14, 0
    %p83 = por %p81, %p82
    %s84 = ssub.s32 %s15, %s27
    %p85 = scmp.eq.s32.totalorder %s84, 0
    %s87 = sadd.s32 %s86, 1
    %s88 = scalar_select %p85, %s86, %s87
    %p91 = pneg %p85
    %p92 = scmp.eq.s32.totalorder %s8, 2
    %p93 = por %p91, %p92
    %p94 = scmp.ne.s32.totalorder %s86, %s89
    %p95 = scmp.eq.s32.totalorder %s8, 0
    %p96 = por %p94, %p95
    %p97 = scmp.ne.s32.totalorder %s86, %s89
    %p98 = scmp.eq.s32.totalorder %s13, 2
    %p99 = por %p97, %p98
    %p100 = scmp.ne.s32.totalorder %s89, %s90
    %p101 = scmp.eq.s32.totalorder %s13, 0
    %p102 = por %p100, %p101
    %p103 = scmp.ne.s32.totalorder %s89, %s90
    %p104 = scmp.eq.s32.totalorder %s14, 2
    %p105 = por %p103, %p104
    %p107 = scmp.ne.s32.totalorder %s90, %s106
    %p108 = scmp.eq.s32.totalorder %s14, 0
    %p109 = por %p107, %p108
    %p110 = scmp.le.s32.totalorder 1, %s8
    %p111 = scmp.lt.s32.totalorder %s8, 4
    %p112 = pnand %p110, %p111
    %p113 = pneg %p112
    // Predicated region
    $region9: #{_efdm_loss_impl.8} parent=5 // pred_check
      _
    $region10: #{_efdm_loss_impl.8} parent=5 // pred_check_branch
      %115 = sbr.rel (%p112) target = $region12
    $region11: #{_efdm_loss_impl.8} parent=5 // pred_region
      %s116 = ssub.s32 %s8, 1
    $region12: #{_efdm_loss_impl.8} parent=5 // pred_fallthru
      _
    %p117 = scmp.lt.s32.totalorder %s8, 3
    // Predicated region
    $region13: #{_efdm_loss_impl.8} parent=5 // pred_check
      %p118 = pneg %p117
    $region14: #{_efdm_loss_impl.8} parent=5 // pred_check_branch
      %120 = sbr.rel (%p118) target = $region16
    $region15: #{_efdm_loss_impl.8} parent=5 // pred_region
      // Predicated region
      $region17: #{_efdm_loss_impl.8} parent=15 // pred_check
        %p121 = pneg %p42
      $region18: #{_efdm_loss_impl.8} parent=15 // pred_check_branch
        %123 = sbr.rel (%p121) target = $region20
      $region19: #{_efdm_loss_impl.8} parent=15 // pred_region
        %s124 = smul.u32 2, %s16
        %p125 = scmp.lt.s32.totalorder %s15, 2
        %s126 = scalar_select %p125, %s15, 2
        %p127 = scmp.lt.s32.totalorder %s124, 1
        %s128 = scalar_select %p127, %s124, 1
        %s129 = smul.addr %s126, 4
        %s130 = sadd.s32 %s128, %s129
        %s131 = smul.addr %s130, 8
        %s132 = scalar_lea.vmem %s0, %s131
        %s133 = smul.u32 2, %s16
      $region20: #{_efdm_loss_impl.8} parent=15 // pred_fallthru
        _
      // Predicated region
      $region21: #{_efdm_loss_impl.8} parent=15 // pred_check
        %p134 = pneg %p70
      $region22: #{_efdm_loss_impl.8} parent=15 // pred_check_branch
        %136 = sbr.rel (%p134) target = $region24
      $region23: #{_efdm_loss_impl.8} parent=15 // pred_region
        %s137 = smul.u32 2, %s16
        %p138 = scmp.lt.s32.totalorder %s15, 2
        %s139 = scalar_select %p138, %s15, 2
        %p140 = scmp.lt.s32.totalorder %s137, 1
        %s141 = scalar_select %p140, %s137, 1
        %s142 = smul.addr %s139, 4
        %s143 = sadd.s32 %s141, %s142
        %s144 = smul.addr %s143, 8
        %s145 = scalar_lea.vmem %s1, %s144
        %s146 = smul.u32 2, %s16
      $region24: #{_efdm_loss_impl.8} parent=15 // pred_fallthru
        _
    $region16: #{_efdm_loss_impl.8} parent=5 // pred_fallthru
      _
    %p147 = scmp.le.s32.totalorder 1, %s8
    %p148 = scmp.lt.s32.totalorder %s8, 4
    %p149 = pnand %p147, %p148
    %p150 = pneg %p149
    // Predicated region
    $region25: #{_efdm_loss_impl.8} parent=5 // pred_check
      _
    $region26: #{_efdm_loss_impl.8} parent=5 // pred_check_branch
      %152 = sbr.rel (%p149) target = $region28
    $region27: #{_efdm_loss_impl.8} parent=5 // pred_region
      %s153 = ssub.s32 %s8, 1
      %s154 = smul.u32 2, %s18
      %p155 = scmp.lt.s32.totalorder %s17, 2
      %s156 = scalar_select %p155, %s17, 2
      %p157 = scmp.lt.s32.totalorder %s154, 1
      %s158 = scalar_select %p157, %s154, 1
      %s159 = smul.addr %s156, 4
      %s160 = sadd.s32 %s158, %s159
      %s161 = smul.addr %s160, 8
      %s162 = scalar_lea.vmem %s0, %s161
      %p163 = pneg %p48
      %p164 = pneg %p45
      %s165 = smul.u32 2, %s18
      %p166 = scmp.lt.s32.totalorder %s17, 2
      %s167 = scalar_select %p166, %s17, 2
      %p168 = scmp.lt.s32.totalorder %s165, 1
      %s169 = scalar_select %p168, %s165, 1
      %s170 = smul.addr %s167, 4
      %s171 = sadd.s32 %s169, %s170
      %s172 = smul.addr %s171, 8
      %s173 = scalar_lea.vmem %s1, %s172
      %p174 = pneg %p76
      %p175 = pneg %p73
      %p176 = pneg %p102
      %p177 = pneg %p99
      %p178 = scmp.lt.s32.totalorder %s17, 2
      %s179 = scalar_select %p178, %s17, 2
      %s180 = smul.addr %s179, 2
      %s181 = scalar_lea.vmem %s2, %s180
      %s182 = smul.u32 2, %s18
      %p183 = scmp.lt.s32.totalorder %s17, 2
      %s184 = scalar_select %p183, %s17, 2
      %p185 = scmp.lt.s32.totalorder %s182, 1
      %s186 = scalar_select %p185, %s182, 1
      %s187 = smul.addr %s184, 4
      %s188 = sadd.s32 %s186, %s187
      %s189 = smul.addr %s188, 8
      %s190 = scalar_lea.vmem %s0, %s189
      %s191 = smul.u32 2, %s18
      %s192 = smul.u32 2, %s18
      %p193 = scmp.lt.s32.totalorder %s17, 2
      %s194 = scalar_select %p193, %s17, 2
      %p195 = scmp.lt.s32.totalorder %s192, 1
      %s196 = scalar_select %p195, %s192, 1
      %s197 = smul.addr %s194, 4
      %s198 = sadd.s32 %s196, %s197
      %s199 = smul.addr %s198, 8
      %s200 = scalar_lea.vmem %s1, %s199
      %s201 = smul.u32 2, %s18
      %p202 = scmp.lt.s32.totalorder %s17, 2
      %s203 = scalar_select %p202, %s17, 2
      %s204 = smul.addr %s203, 2
      %s205 = scalar_lea.vmem %s2, %s204
      %p206 = scmp.eq.s32.totalorder %s18, 0
      // Predicated region
      $region29: #{_efdm_loss_impl.8} parent=27 // pred_check
        %p207 = pneg %p206
      $region30: #{_efdm_loss_impl.8} parent=27 // pred_check_branch
        %209 = sbr.rel (%p207) target = $region32
      $region31: #{_efdm_loss_impl.8} parent=27 // pred_region
        %210 = vst [vmem:[#allocation2] sm:$0xff] 0.0
        %211 = vst [vmem:[#allocation2 + $0x8] sm:$0xff] 0.0
        %212 = vst [vmem:[#allocation2 + $0x10] sm:$0xff] 0.0
        %213 = vst [vmem:[#allocation2 + $0x18] sm:$0xff] 0.0
      $region32: #{_efdm_loss_impl.8} parent=27 // pred_fallthru
        _
      %v214 = vld [vmem:[%s190] sm:$0xff]
      %v215 = vld [vmem:[%s190 + $0x8] sm:$0xff]
      %v216 = vld [vmem:[%s200] sm:$0xff]
      %v217 = vld [vmem:[%s200 + $0x8] sm:$0xff]
      %v218 = vsub.f32 %v214, %v216
      %v219 = vsub.f32 %v215, %v217
      %v220 = vmul.f32 %v218, %v218
      %v221 = vmul.f32 %v219, %v219
      %v222 = vadd.f32 %v220, %v221
      %s223 = scalar_lea.vmem %s200, 16
      %v224 = vld [vmem:[%s223] sm:$0xff]
      %v225 = vld [vmem:[%s223 + $0x8] sm:$0xff]
      %v226 = vsub.f32 %v214, %v224
      %v227 = vsub.f32 %v215, %v225
      %v228 = vmul.f32 %v226, %v226
      %v229 = vmul.f32 %v227, %v227
      %v230 = vadd.f32 %v228, %v229
      %s231 = scalar_lea.vmem %s190, 16
      %v232 = vld [vmem:[%s231] sm:$0xff]
      %v233 = vld [vmem:[%s231 + $0x8] sm:$0xff]
      %v234 = vsub.f32 %v232, %v216
      %v235 = vsub.f32 %v233, %v217
      %v236 = vmul.f32 %v234, %v234
      %v237 = vmul.f32 %v235, %v235
      %v238 = vadd.f32 %v236, %v237
      %v239 = vsub.f32 %v232, %v224
      %v240 = vsub.f32 %v233, %v225
      %v241 = vmul.f32 %v239, %v239
      %v242 = vmul.f32 %v240, %v240
      %v243 = vadd.f32 %v241, %v242
      %v244 = vld [vmem:[#allocation2] sm:$0xff]
      %v245 = vld [vmem:[#allocation2 + $0x8] sm:$0xff]
      %v246 = vld [vmem:[#allocation2 + $0x10] sm:$0xff]
      %v247 = vld [vmem:[#allocation2 + $0x18] sm:$0xff]
      %v248 = vadd.f32 %v244, %v222
      %v249 = vadd.f32 %v245, %v230
      %v250 = vadd.f32 %v246, %v238
      %v251 = vadd.f32 %v247, %v243
      %252 = vst [vmem:[#allocation2] sm:$0xff] %v248
      %253 = vst [vmem:[#allocation2 + $0x8] sm:$0xff] %v249
      %254 = vst [vmem:[#allocation2 + $0x10] sm:$0xff] %v250
      %255 = vst [vmem:[#allocation2 + $0x18] sm:$0xff] %v251
      // Predicated region
      $region33: #{_efdm_loss_impl.8} parent=27 // pred_check
        %p256 = pneg %p206
      $region34: #{_efdm_loss_impl.8} parent=27 // pred_check_branch
        %258 = sbr.rel (%p256) target = $region36
      $region35: #{_efdm_loss_impl.8} parent=27 // pred_region
        %v259 = vld [vmem:[#allocation2] sm:$0xff]
        %v260 = vld [vmem:[#allocation2 + $0x8] sm:$0xff]
        %v261 = vld [vmem:[#allocation2 + $0x10] sm:$0xff]
        %v262 = vld [vmem:[#allocation2 + $0x18] sm:$0xff]
        %v263 = vrot.slane %v259, 4
        %v264 = vadd.f32 %v259, %v263
        %v265 = vrot.slane %v264, 2
        %v266 = vadd.f32 %v264, %v265
        %v267 = vrot.slane %v266, 1
        %v268 = vadd.f32 %v266, %v267
        %v269 = vrot.slane %v260, 4
        %v270 = vadd.f32 %v260, %v269
        %v271 = vrot.slane %v270, 2
        %v272 = vadd.f32 %v270, %v271
        %v273 = vrot.slane %v272, 1
        %v274 = vadd.f32 %v272, %v273
        %v275 = vrot.slane %v261, 4
        %v276 = vadd.f32 %v261, %v275
        %v277 = vrot.slane %v276, 2
        %v278 = vadd.f32 %v276, %v277
        %v279 = vrot.slane %v278, 1
        %v280 = vadd.f32 %v278, %v279
        %v281 = vrot.slane %v262, 4
        %v282 = vadd.f32 %v262, %v281
        %v283 = vrot.slane %v282, 2
        %v284 = vadd.f32 %v282, %v283
        %v285 = vrot.slane %v284, 1
        %v286 = vadd.f32 %v284, %v285
        %vm291 = vcmask 1041409
        %v292 = vsel %vm291, %v274, %v268
        %v293 = vsel %vm291, %v286, %v280
        %vm296 = vcmask 1041408
        %v297 = vsel %vm296, %v292, 0.0
        %298 = vadd.xlane.f32.xlu0 %v297
        %v299 = vpop.xlane.xlu0 %298
        %v300 = vsel %vm296, %v293, 0.0
        %301 = vadd.xlane.f32.xlu0 %v300
        %v302 = vpop.xlane.xlu0 %301
        %v305 = vlaneseq
        %v306 = vand.u32 %v305, 127
        %v307 = vperm.slane %v299, %v306
        %v308 = vperm.slane %v302, %v306
        %v309 = vsel %vm291, %v308, %v307
        %vm311 = vcmask 9216
        %312 = vst.msk [vmem:[%s205] sm:$0x3] %vm311, %v309
      $region36: #{_efdm_loss_impl.8} parent=27 // pred_fallthru
        _
      %p313 = scmp.lt.s32.totalorder %s17, 2
      %s314 = scalar_select %p313, %s17, 2
      %s315 = smul.addr %s314, 2
      %s316 = scalar_lea.vmem %s2, %s315
      // Predicated region
      $region37: #{_efdm_loss_impl.8} parent=27 // pred_check
        %p317 = pneg %p99
      $region38: #{_efdm_loss_impl.8} parent=27 // pred_check_branch
        %319 = sbr.rel (%p317) target = $region40
      $region39: #{_efdm_loss_impl.8} parent=27 // pred_region
        _
      $region40: #{_efdm_loss_impl.8} parent=27 // pred_fallthru
        _
    $region28: #{_efdm_loss_impl.8} parent=5 // pred_fallthru
      _
    %p320 = scmp.le.s32.totalorder 2, %s8
    // Predicated region
    $region41: #{_efdm_loss_impl.8} parent=5 // pred_check
      %p321 = pneg %p320
    $region42: #{_efdm_loss_impl.8} parent=5 // pred_check_branch
      %323 = sbr.rel (%p321) target = $region44
    $region43: #{_efdm_loss_impl.8} parent=5 // pred_region
      %s324 = ssub.s32 %s8, 2
      // Predicated region
      $region45: #{_efdm_loss_impl.8} parent=43 // pred_check
        %p325 = pneg %p105
      $region46: #{_efdm_loss_impl.8} parent=43 // pred_check_branch
        %327 = sbr.rel (%p325) target = $region48
      $region47: #{_efdm_loss_impl.8} parent=43 // pred_region
        %p328 = scmp.lt.s32.totalorder %s19, 2
        %s329 = scalar_select %p328, %s19, 2
        %s330 = smul.addr %s329, 2
        %s331 = scalar_lea.vmem %s2, %s330
      $region48: #{_efdm_loss_impl.8} parent=43 // pred_fallthru
        _
    $region44: #{_efdm_loss_impl.8} parent=5 // pred_fallthru
      _
  $region6: #{_efdm_loss_impl.8} parent=0 // loop_footer
    %s12 = sadd.s32 1, %s8
  $region7: #{_efdm_loss_impl.8} parent=0 // loop_footer_branch
    %7 = sbr.rel target = $region3
  $region8: #{_efdm_loss_impl.8} parent=0 // loop_exit
    _

// kernel: _efdm_loss_impl.9
$region0: #{_efdm_loss_impl.9}
  #allocation0 [shape = 'u32[]', space=smem, size = 0x4, offset = 0x4, fixed_abs, tag = 'smem constant byte address 0x4 - core index']
  #allocation1 [shape = 'u32[72,128]{1,0:T(1,128)}', space=vmem, size = 0x9000, scoped, tag = 'internal scratch']
  #allocation2 [shape = 'f32[2,2,8,128]{3,2,1,0:T(8,128)}', space=vmem, size = 0x4000, scoped, tag = 'scratch operand']
  %s0 = inlined_call_operand.vmem [shape: f32[1,2,8,128], index: 0, kind: input, shape index: {}]
  %s1 = inlined_call_operand.vmem [shape: f32[1,2,8,128], index: 1, kind: input, shape index: {}]
  %s2 = inlined_call_operand.vmem [shape: f32[1,2,2], index: 2, kind: output, shape index: {}]
  %s3 = sld [smem:[#allocation0]]
  $region26: #{_efdm_loss_impl.9} parent=0
    _
  %s5 = ssub.s32 1, %s3
  %s6 = scalar_select 0, %s5, %s3
  // Predicated region
  $region2: #{_efdm_loss_impl.9} parent=0 // pred_check
    _
  $region3: #{_efdm_loss_impl.9} parent=0 // pred_check_branch
    %8 = sbr.rel (0) target = $region5
  $region4: #{_efdm_loss_impl.9} parent=0 // pred_region
    _
  $region5: #{_efdm_loss_impl.9} parent=0 // pred_fallthru
    _
  // Predicated region
  $region6: #{_efdm_loss_impl.9} parent=0 // pred_check
    _
  $region7: #{_efdm_loss_impl.9} parent=0 // pred_check_branch
    %10 = sbr.rel (0) target = $region9
  $region8: #{_efdm_loss_impl.9} parent=0 // pred_region
    _
  $region9: #{_efdm_loss_impl.9} parent=0 // pred_fallthru
    _
  %p11 = scmp.eq.s32.totalorder 0, 0
  // Predicated region
  $region10: #{_efdm_loss_impl.9} parent=0 // pred_check
    %p12 = pneg %p11
  $region11: #{_efdm_loss_impl.9} parent=0 // pred_check_branch
    %14 = sbr.rel (%p12) target = $region13
  $region12: #{_efdm_loss_impl.9} parent=0 // pred_region
    %15 = vst [vmem:[#allocation2] sm:$0xff] 0.0
    %16 = vst [vmem:[#allocation2 + $0x8] sm:$0xff] 0.0
    %17 = vst [vmem:[#allocation2 + $0x10] sm:$0xff] 0.0
    %18 = vst [vmem:[#allocation2 + $0x18] sm:$0xff] 0.0
  $region13: #{_efdm_loss_impl.9} parent=0 // pred_fallthru
    _
  %v19 = vld [vmem:[%s0] sm:$0xff]
  %v20 = vld [vmem:[%s1] sm:$0xff]
  %v21 = vsub.f32 %v19, %v20
  %v22 = vmul.f32 %v21, %v21
  %v23 = vadd.f32 %v22, 0.0
  %s24 = scalar_lea.vmem %s1, 8
  %v25 = vld [vmem:[%s24] sm:$0xff]
  %v26 = vsub.f32 %v19, %v25
  %v27 = vmul.f32 %v26, %v26
  %v28 = vadd.f32 %v27, 0.0
  %s29 = scalar_lea.vmem %s0, 8
  %v30 = vld [vmem:[%s29] sm:$0xff]
  %v31 = vsub.f32 %v30, %v20
  %v32 = vmul.f32 %v31, %v31
  %v33 = vadd.f32 %v32, 0.0
  %v34 = vsub.f32 %v30, %v25
  %v35 = vmul.f32 %v34, %v34
  %v36 = vadd.f32 %v35, 0.0
  %v37 = vld [vmem:[#allocation2] sm:$0xff]
  %v38 = vld [vmem:[#allocation2 + $0x8] sm:$0xff]
  %v39 = vld [vmem:[#allocation2 + $0x10] sm:$0xff]
  %v40 = vld [vmem:[#allocation2 + $0x18] sm:$0xff]
  %v41 = vadd.f32 %v37, %v23
  %v42 = vadd.f32 %v38, %v28
  %v43 = vadd.f32 %v39, %v33
  %v44 = vadd.f32 %v40, %v36
  %45 = vst [vmem:[#allocation2] sm:$0xff] %v41
  %46 = vst [vmem:[#allocation2 + $0x8] sm:$0xff] %v42
  %47 = vst [vmem:[#allocation2 + $0x10] sm:$0xff] %v43
  %48 = vst [vmem:[#allocation2 + $0x18] sm:$0xff] %v44
  // Predicated region
  $region14: #{_efdm_loss_impl.9} parent=0 // pred_check
    %p49 = pneg %p11
  $region15: #{_efdm_loss_impl.9} parent=0 // pred_check_branch
    %51 = sbr.rel (%p49) target = $region17
  $region16: #{_efdm_loss_impl.9} parent=0 // pred_region
    %v52 = vld [vmem:[#allocation2] sm:$0xff]
    %v53 = vld [vmem:[#allocation2 + $0x8] sm:$0xff]
    %v54 = vld [vmem:[#allocation2 + $0x10] sm:$0xff]
    %v55 = vld [vmem:[#allocation2 + $0x18] sm:$0xff]
    %v56 = vrot.slane %v52, 4
    %v57 = vadd.f32 %v52, %v56
    %v58 = vrot.slane %v57, 2
    %v59 = vadd.f32 %v57, %v58
    %v60 = vrot.slane %v59, 1
    %v61 = vadd.f32 %v59, %v60
    %v62 = vrot.slane %v53, 4
    %v63 = vadd.f32 %v53, %v62
    %v64 = vrot.slane %v63, 2
    %v65 = vadd.f32 %v63, %v64
    %v66 = vrot.slane %v65, 1
    %v67 = vadd.f32 %v65, %v66
    %v68 = vrot.slane %v54, 4
    %v69 = vadd.f32 %v54, %v68
    %v70 = vrot.slane %v69, 2
    %v71 = vadd.f32 %v69, %v70
    %v72 = vrot.slane %v71, 1
    %v73 = vadd.f32 %v71, %v72
    %v74 = vrot.slane %v55, 4
    %v75 = vadd.f32 %v55, %v74
    %v76 = vrot.slane %v75, 2
    %v77 = vadd.f32 %v75, %v76
    %v78 = vrot.slane %v77, 1
    %v79 = vadd.f32 %v77, %v78
    %vm84 = vcmask 1041409
    %v85 = vsel %vm84, %v67, %v61
    %v86 = vsel %vm84, %v79, %v73
    %vm89 = vcmask 1041408
    %v90 = vsel %vm89, %v85, 0.0
    %91 = vadd.xlane.f32.xlu0 %v90
    %v92 = vpop.xlane.xlu0 %91
    %v93 = vsel %vm89, %v86, 0.0
    %94 = vadd.xlane.f32.xlu0 %v93
    %v95 = vpop.xlane.xlu0 %94
    %v98 = vlaneseq
    %v99 = vand.u32 %v98, 127
    %v100 = vperm.slane %v92, %v99
    %v101 = vperm.slane %v95, %v99
    %v102 = vsel %vm84, %v101, %v100
    %vm104 = vcmask 9216
    %105 = vst.msk [vmem:[%s2] sm:$0x3] %vm104, %v102
  $region17: #{_efdm_loss_impl.9} parent=0 // pred_fallthru
    _
  // Predicated region
  $region18: #{_efdm_loss_impl.9} parent=0 // pred_check
    _
  $region19: #{_efdm_loss_impl.9} parent=0 // pred_check_branch
    %107 = sbr.rel (0) target = $region21
  $region20: #{_efdm_loss_impl.9} parent=0 // pred_region
    _
  $region21: #{_efdm_loss_impl.9} parent=0 // pred_fallthru
    _
  // Predicated region
  $region22: #{_efdm_loss_impl.9} parent=0 // pred_check
    _
  $region23: #{_efdm_loss_impl.9} parent=0 // pred_check_branch
    %109 = sbr.rel (0) target = $region25
  $region24: #{_efdm_loss_impl.9} parent=0 // pred_region
    _
  $region25: #{_efdm_loss_impl.9} parent=0 // pred_fallthru
    _

</llo_original>
